<compile_context>
chip_gen: v6e
topology: v6e:2x2x1
jax: 0.10.0
libtpu: 0.0.40
codegen_flags: <defaults>
</compile_context>

<pallas_src>
import jax
import jax.numpy as jnp
from jax.experimental import pallas as pl
from jax.experimental.pallas import tpu as pltpu


def _round_up(x, m):
    return ((x + m - 1) // m) * m


def mlp_kernel(x_ref, w1_ref, b1_ref, w2_ref, b2_ref,
               g_ref, beta_ref, w3_ref, b3_ref, o_ref):
    # x_ref: (TB, 784) f32 tile of the flattened batch. Cast to bf16 in-kernel
    # (hides under MXU slack); K=784 needs the same 7 MXU weight passes as a
    # padded 896, so no pre-padding of the K axis is required.
    x = x_ref[...].astype(w1_ref.dtype)

    # Linear(784->512) + ReLU. bf16 operands, f32 MXU accumulation.
    h1 = jnp.dot(x, w1_ref[...], preferred_element_type=jnp.float32) + b1_ref[...]
    h1 = jnp.maximum(h1, 0.0)

    # Linear(512->256) + ReLU.
    h2 = jnp.dot(h1.astype(w2_ref.dtype), w2_ref[...],
                 preferred_element_type=jnp.float32) + b2_ref[...]
    h2 = jnp.maximum(h2, 0.0)

    # LayerNorm(256) over the last axis, all in f32 (eps = PyTorch default 1e-5).
    mean = jnp.mean(h2, axis=-1, keepdims=True)
    var = jnp.mean((h2 - mean) * (h2 - mean), axis=-1, keepdims=True)
    hn = (h2 - mean) * jax.lax.rsqrt(var + 1e-5)
    hn = hn * g_ref[...] + beta_ref[...]

    # Linear(256 -> n_classes padded to 128 lanes): lane-dense output store.
    logits = jnp.dot(hn.astype(w3_ref.dtype), w3_ref[...],
                     preferred_element_type=jnp.float32) + b3_ref[...]
    o_ref[...] = logits.astype(o_ref.dtype)


def prepare_params(params, *, matmul_dtype=jnp.bfloat16):
    """One-time parameter prep (hoisted out of the forward pass).

    Casts matmul weights to bf16 and zero-pads the classifier head to a full
    128-lane width. Biases / LayerNorm params stay f32.
    """
    w1, b1, w2, b2, gamma, beta, w3, b3 = params
    n_classes = w3.shape[1]
    n_pad = _round_up(n_classes, 128)            # 10 -> 128
    return dict(
        w1=w1.astype(matmul_dtype),              # (784, 512), K kept at 784
        b1=b1,
        w2=w2.astype(matmul_dtype),              # (512, 256)
        b2=b2,
        gamma=gamma, beta=beta,
        w3=jnp.pad(w3, ((0, 0), (0, n_pad - n_classes))).astype(matmul_dtype),
        b3=jnp.pad(b3, ((0, 0), (0, n_pad - n_classes))),
        n_classes=n_classes,
        n_pad=n_pad,
    )


def mlp_forward(x_nchw, prep, *, tb=512):
    """x_nchw: (B, 1, 28, 28) float32.  Returns (B, n_classes) float32 logits.

    tb: max batch tile (rows per grid step). Default 512; 1024 also fits VMEM
    comfortably. The effective tile is capped so the grid keeps >= 2 steps
    (megacore sharding on v7x) and shrinks for tiny batches.
    """
    B = x_nchw.shape[0]
    D = x_nchw.shape[1] * x_nchw.shape[2] * x_nchw.shape[3]   # 784
    n_classes, n_pad = prep["n_classes"], prep["n_pad"]

    # Effective batch tile: large, but keep >= 2 grid steps when B allows it,
    # never larger than the 8-aligned batch, always a multiple of 8.
    b8 = _round_up(B, 8)
    tb_eff = min(tb, max(256, _round_up(b8 // 2, 8)))
    tb_eff = max(8, min(tb_eff, b8))
    grid = (pl.cdiv(B, tb_eff),)   # ragged last block is masked by Pallas

    # nn.Flatten(): metadata-only reshape; no pad/cast pass over the batch.
    x = x_nchw.reshape(B, D)

    # Grid-invariant parameters: full tensors every step (~1 MB bf16 total,
    # so VMEM residency is not a concern).
    full = lambda a: pl.BlockSpec(a.shape, lambda i: (0, 0))

    out = pl.pallas_call(
        mlp_kernel,
        out_shape=jax.ShapeDtypeStruct((B, n_pad), jnp.float32),
        grid_spec=pltpu.PrefetchScalarGridSpec(
            num_scalar_prefetch=0,
            grid=grid,
            in_specs=[
                pl.BlockSpec((tb_eff, D), lambda i: (i, 0)),   # x tile (f32)
                full(prep["w1"]), full(prep["b1"]),
                full(prep["w2"]), full(prep["b2"]),
                full(prep["gamma"]), full(prep["beta"]),
                full(prep["w3"]), full(prep["b3"]),
            ],
            out_specs=pl.BlockSpec((tb_eff, n_pad), lambda i: (i, 0)),
        ),
        compiler_params=pltpu.CompilerParams(
            dimension_semantics=("parallel",),      # batch axis shards across TCs
            vmem_limit_bytes=48 * 1024 * 1024,      # headroom below v7x 64 MiB
        ),
    )(x, prep["w1"], prep["b1"], prep["w2"], prep["b2"],
      prep["gamma"], prep["beta"], prep["w3"], prep["b3"])

    # Drop the class padding (glue, plain JAX).
    return out[:, :n_classes]


def init_params(key, n_classes=10):
    """Deterministic synthetic parameters (shapes match the PyTorch module)."""
    k1, k2, k3 = jax.random.split(key, 3)
    d_in, d_h1, d_h2 = 28 * 28, 512, 256
    w1 = jax.random.normal(k1, (d_in, d_h1), jnp.float32) * 0.02
    b1 = jnp.zeros((1, d_h1), jnp.float32)
    w2 = jax.random.normal(k2, (d_h1, d_h2), jnp.float32) * 0.02
    b2 = jnp.zeros((1, d_h2), jnp.float32)
    gamma = jnp.ones((1, d_h2), jnp.float32)      # LayerNorm weight
    beta = jnp.zeros((1, d_h2), jnp.float32)      # LayerNorm bias
    w3 = jax.random.normal(k3, (d_h2, n_classes), jnp.float32) * 0.02
    b3 = jnp.zeros((1, n_classes), jnp.float32)
    return (w1, b1, w2, b2, gamma, beta, w3, b3)


if __name__ == "__main__":
    key = jax.random.PRNGKey(0)
    kx, kp = jax.random.split(key)

    B, n_classes = 8, 10
    x = jax.random.normal(kx, (B, 1, 28, 28), jnp.float32)   # NCHW like PyTorch
    params = init_params(kp, n_classes=n_classes)
    prepared = prepare_params(params)                        # one-time weight prep

    logits = mlp_forward(x, prepared)
    logits = jax.block_until_ready(logits)
    assert logits.shape == (B, n_classes)

    # Pure-JAX f32 reference check (tolerance loosened for bf16 matmul operands).
    w1, b1, w2, b2, g, bt, w3, b3 = params
    xr = x.reshape(B, -1)
    h1 = jnp.maximum(xr @ w1 + b1, 0.0)
    h2 = jnp.maximum(h1 @ w2 + b2, 0.0)
    mu = jnp.mean(h2, axis=-1, keepdims=True)
    var = jnp.mean((h2 - mu) ** 2, axis=-1, keepdims=True)
    ref = ((h2 - mu) / jnp.sqrt(var + 1e-5)) * g + bt
    ref = ref @ w3 + b3
    assert jnp.allclose(logits, ref, atol=3e-2, rtol=3e-2), "mismatch vs reference"

    print("KERNEL_OK")
</pallas_src>

<mosaic_0001>
module attributes {stable_mosaic.version = 11 : i64} {
  func.func @mlp_kernel(%arg0: i32, %arg1: memref<8x784xf32, #tpu.memory_space<vmem>>, %arg2: memref<784x512xbf16, #tpu.memory_space<vmem>>, %arg3: memref<1x512xf32, #tpu.memory_space<vmem>>, %arg4: memref<512x256xbf16, #tpu.memory_space<vmem>>, %arg5: memref<1x256xf32, #tpu.memory_space<vmem>>, %arg6: memref<1x256xf32, #tpu.memory_space<vmem>>, %arg7: memref<1x256xf32, #tpu.memory_space<vmem>>, %arg8: memref<256x128xbf16, #tpu.memory_space<vmem>>, %arg9: memref<1x128xf32, #tpu.memory_space<vmem>>, %arg10: memref<8x128xf32, #tpu.memory_space<vmem>>) attributes {dimension_semantics = [#tpu.dimension_semantics<parallel>], iteration_bounds = array<i64: 1>, scalar_prefetch = 0 : i64, scratch_operands = 0 : i64, tpu.core_type = #tpu.core_type<tc>, window_params = [{transform_indices = @transform_0, window_bounds = array<i64: 8, 784>}, {pipeline_mode = #tpu.pipeline_mode<synchronous>, transform_indices = @transform_1, window_bounds = array<i64: 784, 512>}, {pipeline_mode = #tpu.pipeline_mode<synchronous>, transform_indices = @transform_2, window_bounds = array<i64: 1, 512>}, {pipeline_mode = #tpu.pipeline_mode<synchronous>, transform_indices = @transform_3, window_bounds = array<i64: 512, 256>}, {pipeline_mode = #tpu.pipeline_mode<synchronous>, transform_indices = @transform_4, window_bounds = array<i64: 1, 256>}, {pipeline_mode = #tpu.pipeline_mode<synchronous>, transform_indices = @transform_5, window_bounds = array<i64: 1, 256>}, {pipeline_mode = #tpu.pipeline_mode<synchronous>, transform_indices = @transform_6, window_bounds = array<i64: 1, 256>}, {pipeline_mode = #tpu.pipeline_mode<synchronous>, transform_indices = @transform_7, window_bounds = array<i64: 256, 128>}, {pipeline_mode = #tpu.pipeline_mode<synchronous>, transform_indices = @transform_8, window_bounds = array<i64: 1, 128>}, {transform_indices = @transform_9, window_bounds = array<i64: 8, 128>}]} {
    %c0 = arith.constant 0 : index
    %c0_0 = arith.constant 0 : index
    %0 = vector.load %arg1[%c0, %c0_0] : memref<8x784xf32, #tpu.memory_space<vmem>>, vector<8x784xf32>
    %1 = arith.truncf %0 : vector<8x784xf32> to vector<8x784xbf16>
    %c0_1 = arith.constant 0 : index
    %c0_2 = arith.constant 0 : index
    %2 = vector.load %arg2[%c0_1, %c0_2] : memref<784x512xbf16, #tpu.memory_space<vmem>>, vector<784x512xbf16>
    %cst = arith.constant dense<0.000000e+00> : vector<8x512xf32>
    %3 = tpu.matmul %1, %2, %cst {dimension_numbers = #tpu.dot_dimension_numbers<[1], [0], [0], [1], [0, 0, 1, 1], [], []>} : vector<8x784xbf16>, vector<784x512xbf16>, vector<8x512xf32> -> vector<8x512xf32>
    %c0_3 = arith.constant 0 : index
    %c0_4 = arith.constant 0 : index
    %4 = vector.load %arg3[%c0_3, %c0_4] : memref<1x512xf32, #tpu.memory_space<vmem>>, vector<1x512xf32>
    %5 = vector.broadcast %4 : vector<1x512xf32> to vector<8x512xf32>
    %6 = arith.addf %3, %5 : vector<8x512xf32>
    %cst_5 = arith.constant 0.000000e+00 : f32
    %7 = vector.broadcast %cst_5 : f32 to vector<8x512xf32>
    %8 = arith.maximumf %6, %7 : vector<8x512xf32>
    %9 = arith.truncf %8 : vector<8x512xf32> to vector<8x512xbf16>
    %c0_6 = arith.constant 0 : index
    %c0_7 = arith.constant 0 : index
    %10 = vector.load %arg4[%c0_6, %c0_7] : memref<512x256xbf16, #tpu.memory_space<vmem>>, vector<512x256xbf16>
    %cst_8 = arith.constant dense<0.000000e+00> : vector<8x256xf32>
    %11 = tpu.matmul %9, %10, %cst_8 {dimension_numbers = #tpu.dot_dimension_numbers<[1], [0], [0], [1], [0, 0, 1, 1], [], []>} : vector<8x512xbf16>, vector<512x256xbf16>, vector<8x256xf32> -> vector<8x256xf32>
    %c0_9 = arith.constant 0 : index
    %c0_10 = arith.constant 0 : index
    %12 = vector.load %arg5[%c0_9, %c0_10] : memref<1x256xf32, #tpu.memory_space<vmem>>, vector<1x256xf32>
    %13 = vector.broadcast %12 : vector<1x256xf32> to vector<8x256xf32>
    %14 = arith.addf %11, %13 : vector<8x256xf32>
    %cst_11 = arith.constant 0.000000e+00 : f32
    %15 = vector.broadcast %cst_11 : f32 to vector<8x256xf32>
    %16 = arith.maximumf %14, %15 : vector<8x256xf32>
    %cst_12 = arith.constant dense<0.000000e+00> : vector<8xf32>
    %17 = vector.multi_reduction <add>, %16, %cst_12 [1] : vector<8x256xf32> to vector<8xf32>
    %18 = vector.shape_cast %17 : vector<8xf32> to vector<8x1xf32>
    %cst_13 = arith.constant 2.560000e+02 : f32
    %19 = vector.broadcast %cst_13 : f32 to vector<8x1xf32>
    %20 = arith.divf %18, %19 : vector<8x1xf32>
    %21 = vector.broadcast %20 : vector<8x1xf32> to vector<8x256xf32>
    %22 = arith.subf %16, %21 : vector<8x256xf32>
    %23 = vector.broadcast %20 : vector<8x1xf32> to vector<8x256xf32>
    %24 = arith.subf %16, %23 : vector<8x256xf32>
    %25 = arith.mulf %22, %24 : vector<8x256xf32>
    %cst_14 = arith.constant dense<0.000000e+00> : vector<8xf32>
    %26 = vector.multi_reduction <add>, %25, %cst_14 [1] : vector<8x256xf32> to vector<8xf32>
    %27 = vector.shape_cast %26 : vector<8xf32> to vector<8x1xf32>
    %cst_15 = arith.constant 2.560000e+02 : f32
    %28 = vector.broadcast %cst_15 : f32 to vector<8x1xf32>
    %29 = arith.divf %27, %28 : vector<8x1xf32>
    %30 = vector.broadcast %20 : vector<8x1xf32> to vector<8x256xf32>
    %31 = arith.subf %16, %30 : vector<8x256xf32>
    %cst_16 = arith.constant 9.99999974E-6 : f32
    %32 = vector.broadcast %cst_16 : f32 to vector<8x1xf32>
    %33 = arith.addf %29, %32 : vector<8x1xf32>
    %34 = math.rsqrt %33 : vector<8x1xf32>
    %35 = vector.broadcast %34 : vector<8x1xf32> to vector<8x256xf32>
    %36 = arith.mulf %31, %35 : vector<8x256xf32>
    %c0_17 = arith.constant 0 : index
    %c0_18 = arith.constant 0 : index
    %37 = vector.load %arg6[%c0_17, %c0_18] : memref<1x256xf32, #tpu.memory_space<vmem>>, vector<1x256xf32>
    %38 = vector.broadcast %37 : vector<1x256xf32> to vector<8x256xf32>
    %39 = arith.mulf %36, %38 : vector<8x256xf32>
    %c0_19 = arith.constant 0 : index
    %c0_20 = arith.constant 0 : index
    %40 = vector.load %arg7[%c0_19, %c0_20] : memref<1x256xf32, #tpu.memory_space<vmem>>, vector<1x256xf32>
    %41 = vector.broadcast %40 : vector<1x256xf32> to vector<8x256xf32>
    %42 = arith.addf %39, %41 : vector<8x256xf32>
    %43 = arith.truncf %42 : vector<8x256xf32> to vector<8x256xbf16>
    %c0_21 = arith.constant 0 : index
    %c0_22 = arith.constant 0 : index
    %44 = vector.load %arg8[%c0_21, %c0_22] : memref<256x128xbf16, #tpu.memory_space<vmem>>, vector<256x128xbf16>
    %cst_23 = arith.constant dense<0.000000e+00> : vector<8x128xf32>
    %45 = tpu.matmul %43, %44, %cst_23 {dimension_numbers = #tpu.dot_dimension_numbers<[1], [0], [0], [1], [0, 0, 1, 1], [], []>} : vector<8x256xbf16>, vector<256x128xbf16>, vector<8x128xf32> -> vector<8x128xf32>
    %c0_24 = arith.constant 0 : index
    %c0_25 = arith.constant 0 : index
    %46 = vector.load %arg9[%c0_24, %c0_25] : memref<1x128xf32, #tpu.memory_space<vmem>>, vector<1x128xf32>
    %47 = vector.broadcast %46 : vector<1x128xf32> to vector<8x128xf32>
    %48 = arith.addf %45, %47 : vector<8x128xf32>
    %c0_26 = arith.constant 0 : index
    %c0_27 = arith.constant 0 : index
    %49 = vector.load %arg10[%c0_26, %c0_27] : memref<8x128xf32, #tpu.memory_space<vmem>>, vector<8x128xf32>
    tpu.vector_store %arg10[%c0_26, %c0_27], %48 {strides = array<i32>} : memref<8x128xf32, #tpu.memory_space<vmem>>, vector<8x128xf32>,
    return
  }
  func.func @transform_0(%arg0: i32) -> (i32, i32) {
    %c0_i32 = arith.constant 0 : i32
    %c0_i32_0 = arith.constant 0 : i32
    return %arg0, %c0_i32 : i32, i32
  }
  func.func @transform_1(%arg0: i32) -> (i32, i32) {
    %c0_i32 = arith.constant 0 : i32
    %c0_i32_0 = arith.constant 0 : i32
    %c0_i32_1 = arith.constant 0 : i32
    return %c0_i32, %c0_i32_0 : i32, i32
  }
  func.func @transform_2(%arg0: i32) -> (i32, i32) {
    %c0_i32 = arith.constant 0 : i32
    %c0_i32_0 = arith.constant 0 : i32
    %c0_i32_1 = arith.constant 0 : i32
    return %c0_i32, %c0_i32_0 : i32, i32
  }
  func.func @transform_3(%arg0: i32) -> (i32, i32) {
    %c0_i32 = arith.constant 0 : i32
    %c0_i32_0 = arith.constant 0 : i32
    %c0_i32_1 = arith.constant 0 : i32
    return %c0_i32, %c0_i32_0 : i32, i32
  }
  func.func @transform_4(%arg0: i32) -> (i32, i32) {
    %c0_i32 = arith.constant 0 : i32
    %c0_i32_0 = arith.constant 0 : i32
    %c0_i32_1 = arith.constant 0 : i32
    return %c0_i32, %c0_i32_0 : i32, i32
  }
  func.func @transform_5(%arg0: i32) -> (i32, i32) {
    %c0_i32 = arith.constant 0 : i32
    %c0_i32_0 = arith.constant 0 : i32
    %c0_i32_1 = arith.constant 0 : i32
    return %c0_i32, %c0_i32_0 : i32, i32
  }
  func.func @transform_6(%arg0: i32) -> (i32, i32) {
    %c0_i32 = arith.constant 0 : i32
    %c0_i32_0 = arith.constant 0 : i32
    %c0_i32_1 = arith.constant 0 : i32
    return %c0_i32, %c0_i32_0 : i32, i32
  }
  func.func @transform_7(%arg0: i32) -> (i32, i32) {
    %c0_i32 = arith.constant 0 : i32
    %c0_i32_0 = arith.constant 0 : i32
    %c0_i32_1 = arith.constant 0 : i32
    return %c0_i32, %c0_i32_0 : i32, i32
  }
  func.func @transform_8(%arg0: i32) -> (i32, i32) {
    %c0_i32 = arith.constant 0 : i32
    %c0_i32_0 = arith.constant 0 : i32
    %c0_i32_1 = arith.constant 0 : i32
    return %c0_i32, %c0_i32_0 : i32, i32
  }
  func.func @transform_9(%arg0: i32) -> (i32, i32) {
    %c0_i32 = arith.constant 0 : i32
    %c0_i32_0 = arith.constant 0 : i32
    return %arg0, %c0_i32 : i32, i32
  }
}

</mosaic_0001>

<llo_original>
// kernel: tpu_custom_call.1
$region0: #{tpu_custom_call.1}
  #allocation0 [shape = 'u32[]', space=smem, size = 0x4, offset = 0x4, fixed_abs, tag = 'smem constant byte address 0x4 - core index']
  #allocation1 [shape = 'u32[144,128]{1,0:T(1,128)}', space=vmem, size = 0x12000, scoped, tag = 'internal scratch']
  %s0 = inlined_call_operand.hbm [shape: f32[8,784], index: 0, kind: input, shape index: {}]
  %s1 = inlined_call_operand.hbm [shape: bf16[784,512], index: 1, kind: input, shape index: {}]
  %s2 = inlined_call_operand.hbm [shape: f32[1,512], index: 2, kind: input, shape index: {}]
  %s3 = inlined_call_operand.hbm [shape: bf16[512,256], index: 3, kind: input, shape index: {}]
  %s4 = inlined_call_operand.vmem [shape: f32[1,256], index: 4, kind: input, shape index: {}]
  %s5 = inlined_call_operand.vmem [shape: f32[1,256], index: 5, kind: input, shape index: {}]
  %s6 = inlined_call_operand.vmem [shape: f32[1,256], index: 6, kind: input, shape index: {}]
  %s7 = inlined_call_operand.hbm [shape: bf16[256,128], index: 7, kind: input, shape index: {}]
  %s8 = inlined_call_operand.vmem [shape: f32[1,128], index: 8, kind: input, shape index: {}]
  %s9 = inlined_call_operand.hbm [shape: f32[8,128], index: 9, kind: output, shape index: {}]
  %s10 = sld [smem:[#allocation0]]
  $region66: #{tpu_custom_call.1} parent=0
    _
  %s12 = ssub.s32 1, %s10
  %s13 = scalar_select 0, %s12, %s10
  $region1: #{tpu_custom_call.1} parent=0
    #allocation2 [shape = 'u8[28672]{0}', space=vmem, size = 0x7000, scoped, tag = 'input window, operand 0, single buffered']
    #allocation3 [shape = 's32[1]{0}', space=sflag, size = 0x4, scoped, tag = 'scoped memory for tpu_custom_call.1']
    #allocation4 [shape = 's32[1]{0}', space=sflag, size = 0x4, scoped, tag = 'scoped memory for tpu_custom_call.1']
    #allocation5 [shape = 'u8[802816]{0}', space=vmem, size = 0xc4000, scoped, tag = 'input window, operand 1, single buffered']
    #allocation6 [shape = 's32[1]{0}', space=sflag, size = 0x4, scoped, tag = 'scoped memory for tpu_custom_call.1']
    #allocation7 [shape = 'u8[2048]{0}', space=vmem, size = 0x800, scoped, tag = 'input window, operand 2, single buffered']
    #allocation8 [shape = 'u8[262144]{0}', space=vmem, size = 0x40000, scoped, tag = 'input window, operand 3, single buffered']
    #allocation9 [shape = 's32[1]{0}', space=sflag, size = 0x4, scoped, tag = 'scoped memory for tpu_custom_call.1']
    #allocation10 [shape = 'u8[65536]{0}', space=vmem, size = 0x10000, scoped, tag = 'input window, operand 7, single buffered']
    #allocation11 [shape = 'u8[4096]{0}', space=vmem, size = 0x1000, scoped, tag = 'output window, operand 0, single buffered']
    %14 = vsyncpa [#allocation3], 0
    %15 = vsyncpa [#allocation6], 0
    %16 = vsyncpa [#allocation9], 0
    %17 = vsyncpa [#allocation4], 0
    // Predicated region
    $region2: #{tpu_custom_call.1} parent=1 // pred_check
      _
    $region3: #{tpu_custom_call.1} parent=1 // pred_check_branch
      %19 = sbr.rel (0) target = $region5
    $region4: #{tpu_custom_call.1} parent=1 // pred_region
      %s21 = ssub.s32 896, 896
      %22 = vsyncadd [#allocation3], %s21
      %s24 = sshll.u32 [#allocation2], 4
      %s25 = int_to_ptr.vmem [resolvable:$true] %s24
      %27 = dma.hbm_to_vmem [thread:$0]  %s0, 896, %s25, [#allocation3]
    $region5: #{tpu_custom_call.1} parent=1 // pred_fallthru
      _
    // Predicated region
    $region6: #{tpu_custom_call.1} parent=1 // pred_check
      _
    $region7: #{tpu_custom_call.1} parent=1 // pred_check_branch
      %29 = sbr.rel (0) target = $region9
    $region8: #{tpu_custom_call.1} parent=1 // pred_region
      %s31 = ssub.s32 25088, 25088
      %32 = vsyncadd [#allocation6], %s31
      %s33 = sshll.u32 [#allocation5], 4
      %s34 = int_to_ptr.vmem [resolvable:$true] %s33
      %39 = dma.hbm_to_vmem [thread:$0]  %s1, 25088, %s34, [#allocation6], 256, 256, 16
    $region9: #{tpu_custom_call.1} parent=1 // pred_fallthru
      _
    // Predicated region
    $region10: #{tpu_custom_call.1} parent=1 // pred_check
      _
    $region11: #{tpu_custom_call.1} parent=1 // pred_check_branch
      %41 = sbr.rel (0) target = $region13
    $region12: #{tpu_custom_call.1} parent=1 // pred_region
      %s43 = ssub.s32 64, 64
      %44 = vsyncadd [#allocation6], %s43
      %s46 = sshll.u32 [#allocation7], 4
      %s47 = int_to_ptr.vmem [resolvable:$true] %s46
      %49 = dma.hbm_to_vmem [thread:$0]  %s2, 64, %s47, [#allocation6]
    $region13: #{tpu_custom_call.1} parent=1 // pred_fallthru
      _
    // Predicated region
    $region14: #{tpu_custom_call.1} parent=1 // pred_check
      _
    $region15: #{tpu_custom_call.1} parent=1 // pred_check_branch
      %51 = sbr.rel (0) target = $region17
    $region16: #{tpu_custom_call.1} parent=1 // pred_region
      %s53 = ssub.s32 8192, 8192
      %54 = vsyncadd [#allocation9], %s53
      %s55 = sshll.u32 [#allocation8], 4
      %s56 = int_to_ptr.vmem [resolvable:$true] %s55
      %61 = dma.hbm_to_vmem [thread:$0]  %s3, 8192, %s56, [#allocation9], 128, 128, 8
    $region17: #{tpu_custom_call.1} parent=1 // pred_fallthru
      _
    // Predicated region
    $region18: #{tpu_custom_call.1} parent=1 // pred_check
      _
    $region19: #{tpu_custom_call.1} parent=1 // pred_check_branch
      %63 = sbr.rel (0) target = $region21
    $region20: #{tpu_custom_call.1} parent=1 // pred_region
      _
    $region21: #{tpu_custom_call.1} parent=1 // pred_fallthru
      _
    // Predicated region
    $region22: #{tpu_custom_call.1} parent=1 // pred_check
      _
    $region23: #{tpu_custom_call.1} parent=1 // pred_check_branch
      %65 = sbr.rel (0) target = $region25
    $region24: #{tpu_custom_call.1} parent=1 // pred_region
      _
    $region25: #{tpu_custom_call.1} parent=1 // pred_fallthru
      _
    // Predicated region
    $region26: #{tpu_custom_call.1} parent=1 // pred_check
      _
    $region27: #{tpu_custom_call.1} parent=1 // pred_check_branch
      %67 = sbr.rel (0) target = $region29
    $region28: #{tpu_custom_call.1} parent=1 // pred_region
      _
    $region29: #{tpu_custom_call.1} parent=1 // pred_fallthru
      _
    // Predicated region
    $region30: #{tpu_custom_call.1} parent=1 // pred_check
      _
    $region31: #{tpu_custom_call.1} parent=1 // pred_check_branch
      %69 = sbr.rel (0) target = $region33
    $region32: #{tpu_custom_call.1} parent=1 // pred_region
      %s71 = ssub.s32 2048, 2048
      %72 = vsyncadd [#allocation9], %s71
      %s73 = sshll.u32 [#allocation10], 4
      %s74 = int_to_ptr.vmem [resolvable:$true] %s73
      %79 = dma.hbm_to_vmem [thread:$0]  %s7, 2048, %s74, [#allocation9], 64, 64, 4
    $region33: #{tpu_custom_call.1} parent=1 // pred_fallthru
      _
    // Predicated region
    $region34: #{tpu_custom_call.1} parent=1 // pred_check
      _
    $region35: #{tpu_custom_call.1} parent=1 // pred_check_branch
      %81 = sbr.rel (0) target = $region37
    $region36: #{tpu_custom_call.1} parent=1 // pred_region
      _
    $region37: #{tpu_custom_call.1} parent=1 // pred_fallthru
      _
    // Predicated region
    $region38: #{tpu_custom_call.1} parent=1 // pred_check
      _
    $region39: #{tpu_custom_call.1} parent=1 // pred_check_branch
      %83 = sbr.rel (0) target = $region41
    $region40: #{tpu_custom_call.1} parent=1 // pred_region
      %84 = dma.done [#allocation3], 896
    $region41: #{tpu_custom_call.1} parent=1 // pred_fallthru
      _
    // Predicated region
    $region42: #{tpu_custom_call.1} parent=1 // pred_check
      _
    $region43: #{tpu_custom_call.1} parent=1 // pred_check_branch
      %86 = sbr.rel (0) target = $region45
    $region44: #{tpu_custom_call.1} parent=1 // pred_region
      %87 = dma.done [#allocation6], 25088
    $region45: #{tpu_custom_call.1} parent=1 // pred_fallthru
      _
    // Predicated region
    $region46: #{tpu_custom_call.1} parent=1 // pred_check
      _
    $region47: #{tpu_custom_call.1} parent=1 // pred_check_branch
      %89 = sbr.rel (0) target = $region49
    $region48: #{tpu_custom_call.1} parent=1 // pred_region
      %90 = dma.done [#allocation6], 64
    $region49: #{tpu_custom_call.1} parent=1 // pred_fallthru
      _
    // Predicated region
    $region50: #{tpu_custom_call.1} parent=1 // pred_check
      _
    $region51: #{tpu_custom_call.1} parent=1 // pred_check_branch
      %92 = sbr.rel (0) target = $region53
    $region52: #{tpu_custom_call.1} parent=1 // pred_region
      %93 = dma.done [#allocation9], 8192
    $region53: #{tpu_custom_call.1} parent=1 // pred_fallthru
      _
    // Predicated region
    $region54: #{tpu_custom_call.1} parent=1 // pred_check
      _
    $region55: #{tpu_custom_call.1} parent=1 // pred_check_branch
      %95 = sbr.rel (0) target = $region57
    $region56: #{tpu_custom_call.1} parent=1 // pred_region
      %96 = dma.done [#allocation9], 2048
    $region57: #{tpu_custom_call.1} parent=1 // pred_fallthru
      _
    %v98 = vld [vmem:[#allocation2] sm:$0xff]
    %v99 = vld [vmem:[#allocation2 + $0x8] sm:$0xff]
    %v100 = vld [vmem:[#allocation2 + $0x10] sm:$0xff]
    %v101 = vld [vmem:[#allocation2 + $0x18] sm:$0xff]
    %v102 = vld [vmem:[#allocation2 + $0x20] sm:$0xff]
    %v103 = vld [vmem:[#allocation2 + $0x28] sm:$0xff]
    %v104 = vld [vmem:[#allocation2 + $0x30] sm:$0xff]
    %v105 = vpack.c.bf16 %v98, %v98
    %v106 = vpack.c.bf16 %v99, %v99
    %v107 = vpack.c.bf16 %v100, %v100
    %v108 = vpack.c.bf16 %v101, %v101
    %v109 = vpack.c.bf16 %v102, %v102
    %v110 = vpack.c.bf16 %v103, %v103
    %v111 = vpack.c.bf16 %v104, %v104
    %v112 = vld [vmem:[#allocation5] sm:$0xff]
    %v113 = vld [vmem:[#allocation5 + $0x8] sm:$0xff]
    %v114 = vld [vmem:[#allocation5 + $0x10] sm:$0xff]
    %v115 = vld [vmem:[#allocation5 + $0x18] sm:$0xff]
    %v116 = vld [vmem:[#allocation5 + $0x20] sm:$0xff]
    %v117 = vld [vmem:[#allocation5 + $0x28] sm:$0xff]
    %v118 = vld [vmem:[#allocation5 + $0x30] sm:$0xff]
    %v119 = vld [vmem:[#allocation5 + $0x38] sm:$0xff]
    %v120 = vld [vmem:[#allocation5 + $0x40] sm:$0xff]
    %v121 = vld [vmem:[#allocation5 + $0x48] sm:$0xff]
    %v122 = vld [vmem:[#allocation5 + $0x50] sm:$0xff]
    %v123 = vld [vmem:[#allocation5 + $0x58] sm:$0xff]
    %v124 = vld [vmem:[#allocation5 + $0x60] sm:$0xff]
    %v125 = vld [vmem:[#allocation5 + $0x68] sm:$0xff]
    %v126 = vld [vmem:[#allocation5 + $0x70] sm:$0xff]
    %v127 = vld [vmem:[#allocation5 + $0x78] sm:$0xff]
    %v128 = vld [vmem:[#allocation5 + $0x80] sm:$0xff]
    %v129 = vld [vmem:[#allocation5 + $0x88] sm:$0xff]
    %v130 = vld [vmem:[#allocation5 + $0x90] sm:$0xff]
    %v131 = vld [vmem:[#allocation5 + $0x98] sm:$0xff]
    %v132 = vld [vmem:[#allocation5 + $0xa0] sm:$0xff]
    %v133 = vld [vmem:[#allocation5 + $0xa8] sm:$0xff]
    %v134 = vld [vmem:[#allocation5 + $0xb0] sm:$0xff]
    %v135 = vld [vmem:[#allocation5 + $0xb8] sm:$0xff]
    %v136 = vld [vmem:[#allocation5 + $0xc0] sm:$0xff]
    %v137 = vld [vmem:[#allocation5 + $0xc8] sm:$0xff]
    %v138 = vld [vmem:[#allocation5 + $0xd0] sm:$0xff]
    %v139 = vld [vmem:[#allocation5 + $0xd8] sm:$0xff]
    %v140 = vld [vmem:[#allocation5 + $0xe0] sm:$0xff]
    %v141 = vld [vmem:[#allocation5 + $0xe8] sm:$0xff]
    %v142 = vld [vmem:[#allocation5 + $0xf0] sm:$0xff]
    %v143 = vld [vmem:[#allocation5 + $0xf8] sm:$0xff]
    %v144 = vld [vmem:[#allocation5 + $0x100] sm:$0xff]
    %v145 = vld [vmem:[#allocation5 + $0x108] sm:$0xff]
    %v146 = vld [vmem:[#allocation5 + $0x110] sm:$0xff]
    %v147 = vld [vmem:[#allocation5 + $0x118] sm:$0xff]
    %v148 = vld [vmem:[#allocation5 + $0x120] sm:$0xff]
    %v149 = vld [vmem:[#allocation5 + $0x128] sm:$0xff]
    %v150 = vld [vmem:[#allocation5 + $0x130] sm:$0xff]
    %v151 = vld [vmem:[#allocation5 + $0x138] sm:$0xff]
    %v152 = vld [vmem:[#allocation5 + $0x140] sm:$0xff]
    %v153 = vld [vmem:[#allocation5 + $0x148] sm:$0xff]
    %v154 = vld [vmem:[#allocation5 + $0x150] sm:$0xff]
    %v155 = vld [vmem:[#allocation5 + $0x158] sm:$0xff]
    %v156 = vld [vmem:[#allocation5 + $0x160] sm:$0xff]
    %v157 = vld [vmem:[#allocation5 + $0x168] sm:$0xff]
    %v158 = vld [vmem:[#allocation5 + $0x170] sm:$0xff]
    %v159 = vld [vmem:[#allocation5 + $0x178] sm:$0xff]
    %v160 = vld [vmem:[#allocation5 + $0x180] sm:$0xff]
    %v161 = vld [vmem:[#allocation5 + $0x188] sm:$0xff]
    %v162 = vld [vmem:[#allocation5 + $0x190] sm:$0xff]
    %v163 = vld [vmem:[#allocation5 + $0x198] sm:$0xff]
    %v164 = vld [vmem:[#allocation5 + $0x1a0] sm:$0xff]
    %v165 = vld [vmem:[#allocation5 + $0x1a8] sm:$0xff]
    %v166 = vld [vmem:[#allocation5 + $0x1b0] sm:$0xff]
    %v167 = vld [vmem:[#allocation5 + $0x1b8] sm:$0xff]
    %v168 = vld [vmem:[#allocation5 + $0x1c0] sm:$0xff]
    %v169 = vld [vmem:[#allocation5 + $0x1c8] sm:$0xff]
    %v170 = vld [vmem:[#allocation5 + $0x1d0] sm:$0xff]
    %v171 = vld [vmem:[#allocation5 + $0x1d8] sm:$0xff]
    %v172 = vld [vmem:[#allocation5 + $0x1e0] sm:$0xff]
    %v173 = vld [vmem:[#allocation5 + $0x1e8] sm:$0xff]
    %v174 = vld [vmem:[#allocation5 + $0x1f0] sm:$0xff]
    %v175 = vld [vmem:[#allocation5 + $0x1f8] sm:$0xff]
    %v176 = vld [vmem:[#allocation5 + $0x200] sm:$0xff]
    %v177 = vld [vmem:[#allocation5 + $0x208] sm:$0xff]
    %v178 = vld [vmem:[#allocation5 + $0x210] sm:$0xff]
    %v179 = vld [vmem:[#allocation5 + $0x218] sm:$0xff]
    %v180 = vld [vmem:[#allocation5 + $0x220] sm:$0xff]
    %v181 = vld [vmem:[#allocation5 + $0x228] sm:$0xff]
    %v182 = vld [vmem:[#allocation5 + $0x230] sm:$0xff]
    %v183 = vld [vmem:[#allocation5 + $0x238] sm:$0xff]
    %v184 = vld [vmem:[#allocation5 + $0x240] sm:$0xff]
    %v185 = vld [vmem:[#allocation5 + $0x248] sm:$0xff]
    %v186 = vld [vmem:[#allocation5 + $0x250] sm:$0xff]
    %v187 = vld [vmem:[#allocation5 + $0x258] sm:$0xff]
    %v188 = vld [vmem:[#allocation5 + $0x260] sm:$0xff]
    %v189 = vld [vmem:[#allocation5 + $0x268] sm:$0xff]
    %v190 = vld [vmem:[#allocation5 + $0x270] sm:$0xff]
    %v191 = vld [vmem:[#allocation5 + $0x278] sm:$0xff]
    %v192 = vld [vmem:[#allocation5 + $0x280] sm:$0xff]
    %v193 = vld [vmem:[#allocation5 + $0x288] sm:$0xff]
    %v194 = vld [vmem:[#allocation5 + $0x290] sm:$0xff]
    %v195 = vld [vmem:[#allocation5 + $0x298] sm:$0xff]
    %v196 = vld [vmem:[#allocation5 + $0x2a0] sm:$0xff]
    %v197 = vld [vmem:[#allocation5 + $0x2a8] sm:$0xff]
    %v198 = vld [vmem:[#allocation5 + $0x2b0] sm:$0xff]
    %v199 = vld [vmem:[#allocation5 + $0x2b8] sm:$0xff]
    %v200 = vld [vmem:[#allocation5 + $0x2c0] sm:$0xff]
    %v201 = vld [vmem:[#allocation5 + $0x2c8] sm:$0xff]
    %v202 = vld [vmem:[#allocation5 + $0x2d0] sm:$0xff]
    %v203 = vld [vmem:[#allocation5 + $0x2d8] sm:$0xff]
    %v204 = vld [vmem:[#allocation5 + $0x2e0] sm:$0xff]
    %v205 = vld [vmem:[#allocation5 + $0x2e8] sm:$0xff]
    %v206 = vld [vmem:[#allocation5 + $0x2f0] sm:$0xff]
    %v207 = vld [vmem:[#allocation5 + $0x2f8] sm:$0xff]
    %v208 = vld [vmem:[#allocation5 + $0x300] sm:$0xff]
    %v209 = vld [vmem:[#allocation5 + $0x308] sm:$0xff]
    %v210 = vld [vmem:[#allocation5 + $0x310] sm:$0xff]
    %v211 = vld [vmem:[#allocation5 + $0x318] sm:$0xff]
    %v212 = vld [vmem:[#allocation5 + $0x320] sm:$0xff]
    %v213 = vld [vmem:[#allocation5 + $0x328] sm:$0xff]
    %v214 = vld [vmem:[#allocation5 + $0x330] sm:$0xff]
    %v215 = vld [vmem:[#allocation5 + $0x338] sm:$0xff]
    %v216 = vld [vmem:[#allocation5 + $0x340] sm:$0xff]
    %v217 = vld [vmem:[#allocation5 + $0x348] sm:$0xff]
    %v218 = vld [vmem:[#allocation5 + $0x350] sm:$0xff]
    %v219 = vld [vmem:[#allocation5 + $0x358] sm:$0xff]
    %v220 = vld [vmem:[#allocation5 + $0x360] sm:$0xff]
    %v221 = vld [vmem:[#allocation5 + $0x368] sm:$0xff]
    %v222 = vld [vmem:[#allocation5 + $0x370] sm:$0xff]
    %v223 = vld [vmem:[#allocation5 + $0x378] sm:$0xff]
    %v224 = vld [vmem:[#allocation5 + $0x380] sm:$0xff]
    %v225 = vld [vmem:[#allocation5 + $0x388] sm:$0xff]
    %v226 = vld [vmem:[#allocation5 + $0x390] sm:$0xff]
    %v227 = vld [vmem:[#allocation5 + $0x398] sm:$0xff]
    %v228 = vld [vmem:[#allocation5 + $0x3a0] sm:$0xff]
    %v229 = vld [vmem:[#allocation5 + $0x3a8] sm:$0xff]
    %v230 = vld [vmem:[#allocation5 + $0x3b0] sm:$0xff]
    %v231 = vld [vmem:[#allocation5 + $0x3b8] sm:$0xff]
    %v232 = vld [vmem:[#allocation5 + $0x3c0] sm:$0xff]
    %v233 = vld [vmem:[#allocation5 + $0x3c8] sm:$0xff]
    %v234 = vld [vmem:[#allocation5 + $0x3d0] sm:$0xff]
    %v235 = vld [vmem:[#allocation5 + $0x3d8] sm:$0xff]
    %v236 = vld [vmem:[#allocation5 + $0x3e0] sm:$0xff]
    %v237 = vld [vmem:[#allocation5 + $0x3e8] sm:$0xff]
    %v238 = vld [vmem:[#allocation5 + $0x3f0] sm:$0xff]
    %v239 = vld [vmem:[#allocation5 + $0x3f8] sm:$0xff]
    %v240 = vld [vmem:[#allocation5 + $0x400] sm:$0xff]
    %v241 = vld [vmem:[#allocation5 + $0x408] sm:$0xff]
    %v242 = vld [vmem:[#allocation5 + $0x410] sm:$0xff]
    %v243 = vld [vmem:[#allocation5 + $0x418] sm:$0xff]
    %v244 = vld [vmem:[#allocation5 + $0x420] sm:$0xff]
    %v245 = vld [vmem:[#allocation5 + $0x428] sm:$0xff]
    %v246 = vld [vmem:[#allocation5 + $0x430] sm:$0xff]
    %v247 = vld [vmem:[#allocation5 + $0x438] sm:$0xff]
    %v248 = vld [vmem:[#allocation5 + $0x440] sm:$0xff]
    %v249 = vld [vmem:[#allocation5 + $0x448] sm:$0xff]
    %v250 = vld [vmem:[#allocation5 + $0x450] sm:$0xff]
    %v251 = vld [vmem:[#allocation5 + $0x458] sm:$0xff]
    %v252 = vld [vmem:[#allocation5 + $0x460] sm:$0xff]
    %v253 = vld [vmem:[#allocation5 + $0x468] sm:$0xff]
    %v254 = vld [vmem:[#allocation5 + $0x470] sm:$0xff]
    %v255 = vld [vmem:[#allocation5 + $0x478] sm:$0xff]
    %v256 = vld [vmem:[#allocation5 + $0x480] sm:$0xff]
    %v257 = vld [vmem:[#allocation5 + $0x488] sm:$0xff]
    %v258 = vld [vmem:[#allocation5 + $0x490] sm:$0xff]
    %v259 = vld [vmem:[#allocation5 + $0x498] sm:$0xff]
    %v260 = vld [vmem:[#allocation5 + $0x4a0] sm:$0xff]
    %v261 = vld [vmem:[#allocation5 + $0x4a8] sm:$0xff]
    %v262 = vld [vmem:[#allocation5 + $0x4b0] sm:$0xff]
    %v263 = vld [vmem:[#allocation5 + $0x4b8] sm:$0xff]
    %v264 = vld [vmem:[#allocation5 + $0x4c0] sm:$0xff]
    %v265 = vld [vmem:[#allocation5 + $0x4c8] sm:$0xff]
    %v266 = vld [vmem:[#allocation5 + $0x4d0] sm:$0xff]
    %v267 = vld [vmem:[#allocation5 + $0x4d8] sm:$0xff]
    %v268 = vld [vmem:[#allocation5 + $0x4e0] sm:$0xff]
    %v269 = vld [vmem:[#allocation5 + $0x4e8] sm:$0xff]
    %v270 = vld [vmem:[#allocation5 + $0x4f0] sm:$0xff]
    %v271 = vld [vmem:[#allocation5 + $0x4f8] sm:$0xff]
    %v272 = vld [vmem:[#allocation5 + $0x500] sm:$0xff]
    %v273 = vld [vmem:[#allocation5 + $0x508] sm:$0xff]
    %v274 = vld [vmem:[#allocation5 + $0x510] sm:$0xff]
    %v275 = vld [vmem:[#allocation5 + $0x518] sm:$0xff]
    %v276 = vld [vmem:[#allocation5 + $0x520] sm:$0xff]
    %v277 = vld [vmem:[#allocation5 + $0x528] sm:$0xff]
    %v278 = vld [vmem:[#allocation5 + $0x530] sm:$0xff]
    %v279 = vld [vmem:[#allocation5 + $0x538] sm:$0xff]
    %v280 = vld [vmem:[#allocation5 + $0x540] sm:$0xff]
    %v281 = vld [vmem:[#allocation5 + $0x548] sm:$0xff]
    %v282 = vld [vmem:[#allocation5 + $0x550] sm:$0xff]
    %v283 = vld [vmem:[#allocation5 + $0x558] sm:$0xff]
    %v284 = vld [vmem:[#allocation5 + $0x560] sm:$0xff]
    %v285 = vld [vmem:[#allocation5 + $0x568] sm:$0xff]
    %v286 = vld [vmem:[#allocation5 + $0x570] sm:$0xff]
    %v287 = vld [vmem:[#allocation5 + $0x578] sm:$0xff]
    %v288 = vld [vmem:[#allocation5 + $0x580] sm:$0xff]
    %v289 = vld [vmem:[#allocation5 + $0x588] sm:$0xff]
    %v290 = vld [vmem:[#allocation5 + $0x590] sm:$0xff]
    %v291 = vld [vmem:[#allocation5 + $0x598] sm:$0xff]
    %v292 = vld [vmem:[#allocation5 + $0x5a0] sm:$0xff]
    %v293 = vld [vmem:[#allocation5 + $0x5a8] sm:$0xff]
    %v294 = vld [vmem:[#allocation5 + $0x5b0] sm:$0xff]
    %v295 = vld [vmem:[#allocation5 + $0x5b8] sm:$0xff]
    %v296 = vld [vmem:[#allocation5 + $0x5c0] sm:$0xff]
    %v297 = vld [vmem:[#allocation5 + $0x5c8] sm:$0xff]
    %v298 = vld [vmem:[#allocation5 + $0x5d0] sm:$0xff]
    %v299 = vld [vmem:[#allocation5 + $0x5d8] sm:$0xff]
    %v300 = vld [vmem:[#allocation5 + $0x5e0] sm:$0xff]
    %v301 = vld [vmem:[#allocation5 + $0x5e8] sm:$0xff]
    %v302 = vld [vmem:[#allocation5 + $0x5f0] sm:$0xff]
    %v303 = vld [vmem:[#allocation5 + $0x5f8] sm:$0xff]
    %v304 = vld [vmem:[#allocation5 + $0x600] sm:$0xff]
    %v305 = vld [vmem:[#allocation5 + $0x608] sm:$0xff]
    %v306 = vld [vmem:[#allocation5 + $0x610] sm:$0xff]
    %v307 = vld [vmem:[#allocation5 + $0x618] sm:$0xff]
    %v308 = vld [vmem:[#allocation7] sm:$0xf]
    %v310 = vlaneseq
    %v311 = vshrl.u32 %v310, 7
    %v312 = vsub.s32 0, %v311
    %v313 = vrot.slane %v308, %v312
    %v314 = vlaneseq
    %v315 = vshrl.u32 %v314, 7
    %v316 = vsub.s32 1, %v315
    %v317 = vrot.slane %v308, %v316
    %v318 = vlaneseq
    %v319 = vshrl.u32 %v318, 7
    %v320 = vsub.s32 2, %v319
    %v321 = vrot.slane %v308, %v320
    %v322 = vlaneseq
    %v323 = vshrl.u32 %v322, 7
    %v324 = vsub.s32 3, %v323
    %v325 = vrot.slane %v308, %v324
    %v526 = vunpack.c.l.b16 %v112
    %v527 = vunpack.c.h.b16 %v112
    %v528 = vunpack.c.l.b16 %v113
    %v529 = vunpack.c.h.b16 %v113
    %v530 = vunpack.c.l.b16 %v114
    %v531 = vunpack.c.h.b16 %v114
    %v532 = vunpack.c.l.b16 %v115
    %v533 = vunpack.c.h.b16 %v115
    %v534 = vunpack.c.l.b16 %v116
    %v535 = vunpack.c.h.b16 %v116
    %v536 = vunpack.c.l.b16 %v117
    %v537 = vunpack.c.h.b16 %v117
    %v538 = vunpack.c.l.b16 %v118
    %v539 = vunpack.c.h.b16 %v118
    %v540 = vunpack.c.l.b16 %v119
    %v541 = vunpack.c.h.b16 %v119
    %v542 = vunpack.c.l.b16 %v120
    %v543 = vunpack.c.h.b16 %v120
    %v544 = vunpack.c.l.b16 %v121
    %v545 = vunpack.c.h.b16 %v121
    %v546 = vunpack.c.l.b16 %v122
    %v547 = vunpack.c.h.b16 %v122
    %v548 = vunpack.c.l.b16 %v123
    %v549 = vunpack.c.h.b16 %v123
    %v550 = vunpack.c.l.b16 %v124
    %v551 = vunpack.c.h.b16 %v124
    %v552 = vunpack.c.l.b16 %v125
    %v553 = vunpack.c.h.b16 %v125
    %v554 = vunpack.c.l.b16 %v126
    %v555 = vunpack.c.h.b16 %v126
    %v556 = vunpack.c.l.b16 %v127
    %v557 = vunpack.c.h.b16 %v127
    %v558 = vunpack.c.l.b16 %v128
    %v559 = vunpack.c.h.b16 %v128
    %v560 = vunpack.c.l.b16 %v129
    %v561 = vunpack.c.h.b16 %v129
    %v562 = vunpack.c.l.b16 %v130
    %v563 = vunpack.c.h.b16 %v130
    %v564 = vunpack.c.l.b16 %v131
    %v565 = vunpack.c.h.b16 %v131
    %v566 = vunpack.c.l.b16 %v132
    %v567 = vunpack.c.h.b16 %v132
    %v568 = vunpack.c.l.b16 %v133
    %v569 = vunpack.c.h.b16 %v133
    %v570 = vunpack.c.l.b16 %v134
    %v571 = vunpack.c.h.b16 %v134
    %v572 = vunpack.c.l.b16 %v135
    %v573 = vunpack.c.h.b16 %v135
    %v574 = vunpack.c.l.b16 %v136
    %v575 = vunpack.c.h.b16 %v136
    %v576 = vunpack.c.l.b16 %v137
    %v577 = vunpack.c.h.b16 %v137
    %v578 = vunpack.c.l.b16 %v138
    %v579 = vunpack.c.h.b16 %v138
    %v580 = vunpack.c.l.b16 %v139
    %v581 = vunpack.c.h.b16 %v139
    %v582 = vunpack.c.l.b16 %v140
    %v583 = vunpack.c.h.b16 %v140
    %v584 = vunpack.c.l.b16 %v141
    %v585 = vunpack.c.h.b16 %v141
    %v586 = vunpack.c.l.b16 %v142
    %v587 = vunpack.c.h.b16 %v142
    %v588 = vunpack.c.l.b16 %v143
    %v589 = vunpack.c.h.b16 %v143
    %v590 = vunpack.c.l.b16 %v144
    %v591 = vunpack.c.h.b16 %v144
    %v592 = vunpack.c.l.b16 %v145
    %v593 = vunpack.c.h.b16 %v145
    %v594 = vunpack.c.l.b16 %v146
    %v595 = vunpack.c.h.b16 %v146
    %v596 = vunpack.c.l.b16 %v147
    %v597 = vunpack.c.h.b16 %v147
    %v598 = vunpack.c.l.b16 %v148
    %v599 = vunpack.c.h.b16 %v148
    %v600 = vunpack.c.l.b16 %v149
    %v601 = vunpack.c.h.b16 %v149
    %v602 = vunpack.c.l.b16 %v150
    %v603 = vunpack.c.h.b16 %v150
    %v604 = vunpack.c.l.b16 %v151
    %v605 = vunpack.c.h.b16 %v151
    %v606 = vunpack.c.l.b16 %v152
    %v607 = vunpack.c.h.b16 %v152
    %v608 = vunpack.c.l.b16 %v153
    %v609 = vunpack.c.h.b16 %v153
    %v610 = vunpack.c.l.b16 %v154
    %v611 = vunpack.c.h.b16 %v154
    %v612 = vunpack.c.l.b16 %v155
    %v613 = vunpack.c.h.b16 %v155
    %v614 = vunpack.c.l.b16 %v156
    %v615 = vunpack.c.h.b16 %v156
    %v616 = vunpack.c.l.b16 %v157
    %v617 = vunpack.c.h.b16 %v157
    %v618 = vunpack.c.l.b16 %v158
    %v619 = vunpack.c.h.b16 %v158
    %v620 = vunpack.c.l.b16 %v159
    %v621 = vunpack.c.h.b16 %v159
    %v622 = vunpack.c.l.b16 %v160
    %v623 = vunpack.c.h.b16 %v160
    %v624 = vunpack.c.l.b16 %v161
    %v625 = vunpack.c.h.b16 %v161
    %v626 = vunpack.c.l.b16 %v162
    %v627 = vunpack.c.h.b16 %v162
    %v628 = vunpack.c.l.b16 %v163
    %v629 = vunpack.c.h.b16 %v163
    %v630 = vunpack.c.l.b16 %v164
    %v631 = vunpack.c.h.b16 %v164
    %v632 = vunpack.c.l.b16 %v165
    %v633 = vunpack.c.h.b16 %v165
    %v634 = vunpack.c.l.b16 %v166
    %v635 = vunpack.c.h.b16 %v166
    %v636 = vunpack.c.l.b16 %v167
    %v637 = vunpack.c.h.b16 %v167
    %v638 = vunpack.c.l.b16 %v168
    %v639 = vunpack.c.h.b16 %v168
    %v640 = vunpack.c.l.b16 %v169
    %v641 = vunpack.c.h.b16 %v169
    %v642 = vunpack.c.l.b16 %v170
    %v643 = vunpack.c.h.b16 %v170
    %v644 = vunpack.c.l.b16 %v171
    %v645 = vunpack.c.h.b16 %v171
    %v646 = vunpack.c.l.b16 %v172
    %v647 = vunpack.c.h.b16 %v172
    %v648 = vunpack.c.l.b16 %v173
    %v649 = vunpack.c.h.b16 %v173
    %v650 = vunpack.c.l.b16 %v174
    %v651 = vunpack.c.h.b16 %v174
    %v652 = vunpack.c.l.b16 %v175
    %v653 = vunpack.c.h.b16 %v175
    %v654 = vunpack.c.l.b16 %v176
    %v655 = vunpack.c.h.b16 %v176
    %v656 = vunpack.c.l.b16 %v177
    %v657 = vunpack.c.h.b16 %v177
    %v658 = vunpack.c.l.b16 %v178
    %v659 = vunpack.c.h.b16 %v178
    %v660 = vunpack.c.l.b16 %v179
    %v661 = vunpack.c.h.b16 %v179
    %v662 = vunpack.c.l.b16 %v180
    %v663 = vunpack.c.h.b16 %v180
    %v664 = vunpack.c.l.b16 %v181
    %v665 = vunpack.c.h.b16 %v181
    %v666 = vunpack.c.l.b16 %v182
    %v667 = vunpack.c.h.b16 %v182
    %v668 = vunpack.c.l.b16 %v183
    %v669 = vunpack.c.h.b16 %v183
    %v670 = vunpack.c.l.b16 %v184
    %v671 = vunpack.c.h.b16 %v184
    %v672 = vunpack.c.l.b16 %v185
    %v673 = vunpack.c.h.b16 %v185
    %v674 = vunpack.c.l.b16 %v186
    %v675 = vunpack.c.h.b16 %v186
    %v676 = vunpack.c.l.b16 %v187
    %v677 = vunpack.c.h.b16 %v187
    %v678 = vunpack.c.l.b16 %v188
    %v679 = vunpack.c.h.b16 %v188
    %v680 = vunpack.c.l.b16 %v189
    %v681 = vunpack.c.h.b16 %v189
    %v682 = vunpack.c.l.b16 %v190
    %v683 = vunpack.c.h.b16 %v190
    %v684 = vunpack.c.l.b16 %v191
    %v685 = vunpack.c.h.b16 %v191
    %v686 = vunpack.c.l.b16 %v192
    %v687 = vunpack.c.h.b16 %v192
    %v688 = vunpack.c.l.b16 %v193
    %v689 = vunpack.c.h.b16 %v193
    %v690 = vunpack.c.l.b16 %v194
    %v691 = vunpack.c.h.b16 %v194
    %v692 = vunpack.c.l.b16 %v195
    %v693 = vunpack.c.h.b16 %v195
    %v694 = vunpack.c.l.b16 %v196
    %v695 = vunpack.c.h.b16 %v196
    %v696 = vunpack.c.l.b16 %v197
    %v697 = vunpack.c.h.b16 %v197
    %v698 = vunpack.c.l.b16 %v198
    %v699 = vunpack.c.h.b16 %v198
    %v700 = vunpack.c.l.b16 %v199
    %v701 = vunpack.c.h.b16 %v199
    %v702 = vunpack.c.l.b16 %v200
    %v703 = vunpack.c.h.b16 %v200
    %v704 = vunpack.c.l.b16 %v201
    %v705 = vunpack.c.h.b16 %v201
    %v706 = vunpack.c.l.b16 %v202
    %v707 = vunpack.c.h.b16 %v202
    %v708 = vunpack.c.l.b16 %v203
    %v709 = vunpack.c.h.b16 %v203
    %v710 = vunpack.c.l.b16 %v204
    %v711 = vunpack.c.h.b16 %v204
    %v712 = vunpack.c.l.b16 %v205
    %v713 = vunpack.c.h.b16 %v205
    %v714 = vunpack.c.l.b16 %v206
    %v715 = vunpack.c.h.b16 %v206
    %v716 = vunpack.c.l.b16 %v207
    %v717 = vunpack.c.h.b16 %v207
    %v718 = vunpack.c.l.b16 %v208
    %v719 = vunpack.c.h.b16 %v208
    %v720 = vunpack.c.l.b16 %v209
    %v721 = vunpack.c.h.b16 %v209
    %v722 = vunpack.c.l.b16 %v210
    %v723 = vunpack.c.h.b16 %v210
    %v724 = vunpack.c.l.b16 %v211
    %v725 = vunpack.c.h.b16 %v211
    %v726 = vunpack.c.l.b16 %v212
    %v727 = vunpack.c.h.b16 %v212
    %v728 = vunpack.c.l.b16 %v213
    %v729 = vunpack.c.h.b16 %v213
    %v730 = vunpack.c.l.b16 %v214
    %v731 = vunpack.c.h.b16 %v214
    %v732 = vunpack.c.l.b16 %v215
    %v733 = vunpack.c.h.b16 %v215
    %v734 = vunpack.c.l.b16 %v216
    %v735 = vunpack.c.h.b16 %v216
    %v736 = vunpack.c.l.b16 %v217
    %v737 = vunpack.c.h.b16 %v217
    %v738 = vunpack.c.l.b16 %v218
    %v739 = vunpack.c.h.b16 %v218
    %v740 = vunpack.c.l.b16 %v219
    %v741 = vunpack.c.h.b16 %v219
    %v742 = vunpack.c.l.b16 %v220
    %v743 = vunpack.c.h.b16 %v220
    %v744 = vunpack.c.l.b16 %v221
    %v745 = vunpack.c.h.b16 %v221
    %v746 = vunpack.c.l.b16 %v222
    %v747 = vunpack.c.h.b16 %v222
    %v748 = vunpack.c.l.b16 %v223
    %v749 = vunpack.c.h.b16 %v223
    %v750 = vunpack.c.l.b16 %v224
    %v751 = vunpack.c.h.b16 %v224
    %v752 = vunpack.c.l.b16 %v225
    %v753 = vunpack.c.h.b16 %v225
    %v754 = vunpack.c.l.b16 %v226
    %v755 = vunpack.c.h.b16 %v226
    %v756 = vunpack.c.l.b16 %v227
    %v757 = vunpack.c.h.b16 %v227
    %v758 = vunpack.c.l.b16 %v228
    %v759 = vunpack.c.h.b16 %v228
    %v760 = vunpack.c.l.b16 %v229
    %v761 = vunpack.c.h.b16 %v229
    %v762 = vunpack.c.l.b16 %v230
    %v763 = vunpack.c.h.b16 %v230
    %v764 = vunpack.c.l.b16 %v231
    %v765 = vunpack.c.h.b16 %v231
    %v766 = vunpack.c.l.b16 %v232
    %v767 = vunpack.c.h.b16 %v232
    %v768 = vunpack.c.l.b16 %v233
    %v769 = vunpack.c.h.b16 %v233
    %v770 = vunpack.c.l.b16 %v234
    %v771 = vunpack.c.h.b16 %v234
    %v772 = vunpack.c.l.b16 %v235
    %v773 = vunpack.c.h.b16 %v235
    %v774 = vunpack.c.l.b16 %v236
    %v775 = vunpack.c.h.b16 %v236
    %v776 = vunpack.c.l.b16 %v237
    %v777 = vunpack.c.h.b16 %v237
    %v778 = vunpack.c.l.b16 %v238
    %v779 = vunpack.c.h.b16 %v238
    %v780 = vunpack.c.l.b16 %v239
    %v781 = vunpack.c.h.b16 %v239
    %v782 = vunpack.c.l.b16 %v240
    %v783 = vunpack.c.h.b16 %v240
    %v784 = vunpack.c.l.b16 %v241
    %v785 = vunpack.c.h.b16 %v241
    %v786 = vunpack.c.l.b16 %v242
    %v787 = vunpack.c.h.b16 %v242
    %v788 = vunpack.c.l.b16 %v243
    %v789 = vunpack.c.h.b16 %v243
    %v790 = vunpack.c.l.b16 %v244
    %v791 = vunpack.c.h.b16 %v244
    %v792 = vunpack.c.l.b16 %v245
    %v793 = vunpack.c.h.b16 %v245
    %v794 = vunpack.c.l.b16 %v246
    %v795 = vunpack.c.h.b16 %v246
    %v796 = vunpack.c.l.b16 %v247
    %v797 = vunpack.c.h.b16 %v247
    %v798 = vunpack.c.l.b16 %v248
    %v799 = vunpack.c.h.b16 %v248
    %v800 = vunpack.c.l.b16 %v249
    %v801 = vunpack.c.h.b16 %v249
    %v802 = vunpack.c.l.b16 %v250
    %v803 = vunpack.c.h.b16 %v250
    %v804 = vunpack.c.l.b16 %v251
    %v805 = vunpack.c.h.b16 %v251
    %v806 = vunpack.c.l.b16 %v252
    %v807 = vunpack.c.h.b16 %v252
    %v808 = vunpack.c.l.b16 %v253
    %v809 = vunpack.c.h.b16 %v253
    %v810 = vunpack.c.l.b16 %v254
    %v811 = vunpack.c.h.b16 %v254
    %v812 = vunpack.c.l.b16 %v255
    %v813 = vunpack.c.h.b16 %v255
    %v814 = vunpack.c.l.b16 %v256
    %v815 = vunpack.c.h.b16 %v256
    %v816 = vunpack.c.l.b16 %v257
    %v817 = vunpack.c.h.b16 %v257
    %v818 = vunpack.c.l.b16 %v258
    %v819 = vunpack.c.h.b16 %v258
    %v820 = vunpack.c.l.b16 %v259
    %v821 = vunpack.c.h.b16 %v259
    %v822 = vunpack.c.l.b16 %v260
    %v823 = vunpack.c.h.b16 %v260
    %v824 = vunpack.c.l.b16 %v261
    %v825 = vunpack.c.h.b16 %v261
    %v826 = vunpack.c.l.b16 %v262
    %v827 = vunpack.c.h.b16 %v262
    %v828 = vunpack.c.l.b16 %v263
    %v829 = vunpack.c.h.b16 %v263
    %v830 = vunpack.c.l.b16 %v264
    %v831 = vunpack.c.h.b16 %v264
    %v832 = vunpack.c.l.b16 %v265
    %v833 = vunpack.c.h.b16 %v265
    %v834 = vunpack.c.l.b16 %v266
    %v835 = vunpack.c.h.b16 %v266
    %v836 = vunpack.c.l.b16 %v267
    %v837 = vunpack.c.h.b16 %v267
    %v838 = vunpack.c.l.b16 %v268
    %v839 = vunpack.c.h.b16 %v268
    %v840 = vunpack.c.l.b16 %v269
    %v841 = vunpack.c.h.b16 %v269
    %v842 = vunpack.c.l.b16 %v270
    %v843 = vunpack.c.h.b16 %v270
    %v844 = vunpack.c.l.b16 %v271
    %v845 = vunpack.c.h.b16 %v271
    %v846 = vunpack.c.l.b16 %v272
    %v847 = vunpack.c.h.b16 %v272
    %v848 = vunpack.c.l.b16 %v273
    %v849 = vunpack.c.h.b16 %v273
    %v850 = vunpack.c.l.b16 %v274
    %v851 = vunpack.c.h.b16 %v274
    %v852 = vunpack.c.l.b16 %v275
    %v853 = vunpack.c.h.b16 %v275
    %v854 = vunpack.c.l.b16 %v276
    %v855 = vunpack.c.h.b16 %v276
    %v856 = vunpack.c.l.b16 %v277
    %v857 = vunpack.c.h.b16 %v277
    %v858 = vunpack.c.l.b16 %v278
    %v859 = vunpack.c.h.b16 %v278
    %v860 = vunpack.c.l.b16 %v279
    %v861 = vunpack.c.h.b16 %v279
    %v862 = vunpack.c.l.b16 %v280
    %v863 = vunpack.c.h.b16 %v280
    %v864 = vunpack.c.l.b16 %v281
    %v865 = vunpack.c.h.b16 %v281
    %v866 = vunpack.c.l.b16 %v282
    %v867 = vunpack.c.h.b16 %v282
    %v868 = vunpack.c.l.b16 %v283
    %v869 = vunpack.c.h.b16 %v283
    %v870 = vunpack.c.l.b16 %v284
    %v871 = vunpack.c.h.b16 %v284
    %v872 = vunpack.c.l.b16 %v285
    %v873 = vunpack.c.h.b16 %v285
    %v874 = vunpack.c.l.b16 %v286
    %v875 = vunpack.c.h.b16 %v286
    %v876 = vunpack.c.l.b16 %v287
    %v877 = vunpack.c.h.b16 %v287
    %v878 = vunpack.c.l.b16 %v288
    %v879 = vunpack.c.h.b16 %v288
    %v880 = vunpack.c.l.b16 %v289
    %v881 = vunpack.c.h.b16 %v289
    %v882 = vunpack.c.l.b16 %v290
    %v883 = vunpack.c.h.b16 %v290
    %v884 = vunpack.c.l.b16 %v291
    %v885 = vunpack.c.h.b16 %v291
    %v886 = vunpack.c.l.b16 %v292
    %v887 = vunpack.c.h.b16 %v292
    %v888 = vunpack.c.l.b16 %v293
    %v889 = vunpack.c.h.b16 %v293
    %v890 = vunpack.c.l.b16 %v294
    %v891 = vunpack.c.h.b16 %v294
    %v892 = vunpack.c.l.b16 %v295
    %v893 = vunpack.c.h.b16 %v295
    %v894 = vunpack.c.l.b16 %v296
    %v895 = vunpack.c.h.b16 %v296
    %v896 = vunpack.c.l.b16 %v297
    %v897 = vunpack.c.h.b16 %v297
    %v898 = vunpack.c.l.b16 %v298
    %v899 = vunpack.c.h.b16 %v298
    %v900 = vunpack.c.l.b16 %v299
    %v901 = vunpack.c.h.b16 %v299
    %v902 = vunpack.c.l.b16 %v300
    %v903 = vunpack.c.h.b16 %v300
    %v904 = vunpack.c.l.b16 %v301
    %v905 = vunpack.c.h.b16 %v301
    %v906 = vunpack.c.l.b16 %v302
    %v907 = vunpack.c.h.b16 %v302
    %v908 = vunpack.c.l.b16 %v303
    %v909 = vunpack.c.h.b16 %v303
    %v910 = vunpack.c.l.b16 %v304
    %v911 = vunpack.c.h.b16 %v304
    %v912 = vunpack.c.l.b16 %v305
    %v913 = vunpack.c.h.b16 %v305
    %v914 = vunpack.c.l.b16 %v306
    %v915 = vunpack.c.h.b16 %v306
    %v916 = vunpack.c.l.b16 %v307
    %v917 = vunpack.c.h.b16 %v307
    %v918 = vpack.c.b16 %v530, %v526
    %v919 = vpack.c.b16 %v531, %v527
    %v920 = vpack.c.b16 %v532, %v528
    %v921 = vpack.c.b16 %v533, %v529
    %v922 = vpack.c.b16 %v538, %v534
    %v923 = vpack.c.b16 %v539, %v535
    %v924 = vpack.c.b16 %v540, %v536
    %v925 = vpack.c.b16 %v541, %v537
    %v926 = vpack.c.b16 %v546, %v542
    %v927 = vpack.c.b16 %v547, %v543
    %v928 = vpack.c.b16 %v548, %v544
    %v929 = vpack.c.b16 %v549, %v545
    %v930 = vpack.c.b16 %v554, %v550
    %v931 = vpack.c.b16 %v555, %v551
    %v932 = vpack.c.b16 %v556, %v552
    %v933 = vpack.c.b16 %v557, %v553
    %v934 = vpack.c.b16 %v562, %v558
    %v935 = vpack.c.b16 %v563, %v559
    %v936 = vpack.c.b16 %v564, %v560
    %v937 = vpack.c.b16 %v565, %v561
    %v938 = vpack.c.b16 %v570, %v566
    %v939 = vpack.c.b16 %v571, %v567
    %v940 = vpack.c.b16 %v572, %v568
    %v941 = vpack.c.b16 %v573, %v569
    %v942 = vpack.c.b16 %v578, %v574
    %v943 = vpack.c.b16 %v579, %v575
    %v944 = vpack.c.b16 %v580, %v576
    %v945 = vpack.c.b16 %v581, %v577
    %v946 = vpack.c.b16 %v586, %v582
    %v947 = vpack.c.b16 %v587, %v583
    %v948 = vpack.c.b16 %v588, %v584
    %v949 = vpack.c.b16 %v589, %v585
    %v950 = vpack.c.b16 %v594, %v590
    %v951 = vpack.c.b16 %v595, %v591
    %v952 = vpack.c.b16 %v596, %v592
    %v953 = vpack.c.b16 %v597, %v593
    %v954 = vpack.c.b16 %v602, %v598
    %v955 = vpack.c.b16 %v603, %v599
    %v956 = vpack.c.b16 %v604, %v600
    %v957 = vpack.c.b16 %v605, %v601
    %v958 = vpack.c.b16 %v610, %v606
    %v959 = vpack.c.b16 %v611, %v607
    %v960 = vpack.c.b16 %v612, %v608
    %v961 = vpack.c.b16 %v613, %v609
    %v962 = vpack.c.b16 %v618, %v614
    %v963 = vpack.c.b16 %v619, %v615
    %v964 = vpack.c.b16 %v620, %v616
    %v965 = vpack.c.b16 %v621, %v617
    %v966 = vpack.c.b16 %v626, %v622
    %v967 = vpack.c.b16 %v627, %v623
    %v968 = vpack.c.b16 %v628, %v624
    %v969 = vpack.c.b16 %v629, %v625
    %v970 = vpack.c.b16 %v634, %v630
    %v971 = vpack.c.b16 %v635, %v631
    %v972 = vpack.c.b16 %v636, %v632
    %v973 = vpack.c.b16 %v637, %v633
    %v974 = vpack.c.b16 %v642, %v638
    %v975 = vpack.c.b16 %v643, %v639
    %v976 = vpack.c.b16 %v644, %v640
    %v977 = vpack.c.b16 %v645, %v641
    %v978 = vpack.c.b16 %v650, %v646
    %v979 = vpack.c.b16 %v651, %v647
    %v980 = vpack.c.b16 %v652, %v648
    %v981 = vpack.c.b16 %v653, %v649
    %v982 = vpack.c.b16 %v658, %v654
    %v983 = vpack.c.b16 %v659, %v655
    %v984 = vpack.c.b16 %v660, %v656
    %v985 = vpack.c.b16 %v661, %v657
    %v986 = vpack.c.b16 %v666, %v662
    %v987 = vpack.c.b16 %v667, %v663
    %v988 = vpack.c.b16 %v668, %v664
    %v989 = vpack.c.b16 %v669, %v665
    %v990 = vpack.c.b16 %v674, %v670
    %v991 = vpack.c.b16 %v675, %v671
    %v992 = vpack.c.b16 %v676, %v672
    %v993 = vpack.c.b16 %v677, %v673
    %v994 = vpack.c.b16 %v682, %v678
    %v995 = vpack.c.b16 %v683, %v679
    %v996 = vpack.c.b16 %v684, %v680
    %v997 = vpack.c.b16 %v685, %v681
    %v998 = vpack.c.b16 %v690, %v686
    %v999 = vpack.c.b16 %v691, %v687
    %v1000 = vpack.c.b16 %v692, %v688
    %v1001 = vpack.c.b16 %v693, %v689
    %v1002 = vpack.c.b16 %v698, %v694
    %v1003 = vpack.c.b16 %v699, %v695
    %v1004 = vpack.c.b16 %v700, %v696
    %v1005 = vpack.c.b16 %v701, %v697
    %v1006 = vpack.c.b16 %v706, %v702
    %v1007 = vpack.c.b16 %v707, %v703
    %v1008 = vpack.c.b16 %v708, %v704
    %v1009 = vpack.c.b16 %v709, %v705
    %v1010 = vpack.c.b16 %v714, %v710
    %v1011 = vpack.c.b16 %v715, %v711
    %v1012 = vpack.c.b16 %v716, %v712
    %v1013 = vpack.c.b16 %v717, %v713
    %v1014 = vpack.c.b16 %v722, %v718
    %v1015 = vpack.c.b16 %v723, %v719
    %v1016 = vpack.c.b16 %v724, %v720
    %v1017 = vpack.c.b16 %v725, %v721
    %v1018 = vpack.c.b16 %v730, %v726
    %v1019 = vpack.c.b16 %v731, %v727
    %v1020 = vpack.c.b16 %v732, %v728
    %v1021 = vpack.c.b16 %v733, %v729
    %v1022 = vpack.c.b16 %v738, %v734
    %v1023 = vpack.c.b16 %v739, %v735
    %v1024 = vpack.c.b16 %v740, %v736
    %v1025 = vpack.c.b16 %v741, %v737
    %v1026 = vpack.c.b16 %v746, %v742
    %v1027 = vpack.c.b16 %v747, %v743
    %v1028 = vpack.c.b16 %v748, %v744
    %v1029 = vpack.c.b16 %v749, %v745
    %v1030 = vpack.c.b16 %v754, %v750
    %v1031 = vpack.c.b16 %v755, %v751
    %v1032 = vpack.c.b16 %v756, %v752
    %v1033 = vpack.c.b16 %v757, %v753
    %v1034 = vpack.c.b16 %v762, %v758
    %v1035 = vpack.c.b16 %v763, %v759
    %v1036 = vpack.c.b16 %v764, %v760
    %v1037 = vpack.c.b16 %v765, %v761
    %v1038 = vpack.c.b16 %v770, %v766
    %v1039 = vpack.c.b16 %v771, %v767
    %v1040 = vpack.c.b16 %v772, %v768
    %v1041 = vpack.c.b16 %v773, %v769
    %v1042 = vpack.c.b16 %v778, %v774
    %v1043 = vpack.c.b16 %v779, %v775
    %v1044 = vpack.c.b16 %v780, %v776
    %v1045 = vpack.c.b16 %v781, %v777
    %v1046 = vpack.c.b16 %v786, %v782
    %v1047 = vpack.c.b16 %v787, %v783
    %v1048 = vpack.c.b16 %v788, %v784
    %v1049 = vpack.c.b16 %v789, %v785
    %v1050 = vpack.c.b16 %v794, %v790
    %v1051 = vpack.c.b16 %v795, %v791
    %v1052 = vpack.c.b16 %v796, %v792
    %v1053 = vpack.c.b16 %v797, %v793
    %v1054 = vpack.c.b16 %v802, %v798
    %v1055 = vpack.c.b16 %v803, %v799
    %v1056 = vpack.c.b16 %v804, %v800
    %v1057 = vpack.c.b16 %v805, %v801
    %v1058 = vpack.c.b16 %v810, %v806
    %v1059 = vpack.c.b16 %v811, %v807
    %v1060 = vpack.c.b16 %v812, %v808
    %v1061 = vpack.c.b16 %v813, %v809
    %v1062 = vpack.c.b16 %v818, %v814
    %v1063 = vpack.c.b16 %v819, %v815
    %v1064 = vpack.c.b16 %v820, %v816
    %v1065 = vpack.c.b16 %v821, %v817
    %v1066 = vpack.c.b16 %v826, %v822
    %v1067 = vpack.c.b16 %v827, %v823
    %v1068 = vpack.c.b16 %v828, %v824
    %v1069 = vpack.c.b16 %v829, %v825
    %v1070 = vpack.c.b16 %v834, %v830
    %v1071 = vpack.c.b16 %v835, %v831
    %v1072 = vpack.c.b16 %v836, %v832
    %v1073 = vpack.c.b16 %v837, %v833
    %v1074 = vpack.c.b16 %v842, %v838
    %v1075 = vpack.c.b16 %v843, %v839
    %v1076 = vpack.c.b16 %v844, %v840
    %v1077 = vpack.c.b16 %v845, %v841
    %v1078 = vpack.c.b16 %v850, %v846
    %v1079 = vpack.c.b16 %v851, %v847
    %v1080 = vpack.c.b16 %v852, %v848
    %v1081 = vpack.c.b16 %v853, %v849
    %v1082 = vpack.c.b16 %v858, %v854
    %v1083 = vpack.c.b16 %v859, %v855
    %v1084 = vpack.c.b16 %v860, %v856
    %v1085 = vpack.c.b16 %v861, %v857
    %v1086 = vpack.c.b16 %v866, %v862
    %v1087 = vpack.c.b16 %v867, %v863
    %v1088 = vpack.c.b16 %v868, %v864
    %v1089 = vpack.c.b16 %v869, %v865
    %v1090 = vpack.c.b16 %v874, %v870
    %v1091 = vpack.c.b16 %v875, %v871
    %v1092 = vpack.c.b16 %v876, %v872
    %v1093 = vpack.c.b16 %v877, %v873
    %v1094 = vpack.c.b16 %v882, %v878
    %v1095 = vpack.c.b16 %v883, %v879
    %v1096 = vpack.c.b16 %v884, %v880
    %v1097 = vpack.c.b16 %v885, %v881
    %v1098 = vpack.c.b16 %v890, %v886
    %v1099 = vpack.c.b16 %v891, %v887
    %v1100 = vpack.c.b16 %v892, %v888
    %v1101 = vpack.c.b16 %v893, %v889
    %v1102 = vpack.c.b16 %v898, %v894
    %v1103 = vpack.c.b16 %v899, %v895
    %v1104 = vpack.c.b16 %v900, %v896
    %v1105 = vpack.c.b16 %v901, %v897
    %v1106 = vpack.c.b16 %v906, %v902
    %v1107 = vpack.c.b16 %v907, %v903
    %v1108 = vpack.c.b16 %v908, %v904
    %v1109 = vpack.c.b16 %v909, %v905
    %v1110 = vpack.c.b16 %v914, %v910
    %v1111 = vpack.c.b16 %v915, %v911
    %v1112 = vpack.c.b16 %v916, %v912
    %v1113 = vpack.c.b16 %v917, %v913
    %vm1310 = vcmask 130048
    %v1312 = vsel %vm1310, %v111, 0
    %1314 = vmatprep.subr.bf16.mxu0 %v947
    %1315 = vmatpush1.bf16.msra.mxu0 %v946
    %1316 = vmatprep.subr.bf16.mxu0 %v943
    %1317 = vmatpush1.bf16.msra.mxu0 %v942
    %1318 = vmatprep.subr.bf16.mxu0 %v939
    %1319 = vmatpush1.bf16.msra.mxu0 %v938
    %1320 = vmatprep.subr.bf16.mxu0 %v935
    %1321 = vmatpush1.bf16.msra.mxu0 %v934
    %1322 = vmatprep.subr.bf16.mxu0 %v931
    %1323 = vmatpush1.bf16.msra.mxu0 %v930
    %1324 = vmatprep.subr.bf16.mxu0 %v927
    %1325 = vmatpush1.bf16.msra.mxu0 %v926
    %1326 = vmatprep.subr.bf16.mxu0 %v923
    %1327 = vmatpush1.bf16.msra.mxu0 %v922
    %1328 = vmatprep.subr.bf16.mxu0 %v919
    %1329 = vmatpush1.bf16.msra.mxu0 %v918
    %1330 = vmatprep.subr.bf16.mxu0 %v979
    %1331 = vmatpush2.bf16.msra.mxu0 %v978
    %1332 = vmatprep.subr.bf16.mxu0 %v975
    %1333 = vmatpush2.bf16.msra.mxu0 %v974
    %1334 = vmatprep.subr.bf16.mxu0 %v971
    %1335 = vmatpush2.bf16.msra.mxu0 %v970
    %1336 = vmatprep.subr.bf16.mxu0 %v967
    %1337 = vmatpush2.bf16.msra.mxu0 %v966
    %1338 = vmatprep.subr.bf16.mxu0 %v963
    %1339 = vmatpush2.bf16.msra.mxu0 %v962
    %1340 = vmatprep.subr.bf16.mxu0 %v959
    %1341 = vmatpush2.bf16.msra.mxu0 %v958
    %1342 = vmatprep.subr.bf16.mxu0 %v955
    %1343 = vmatpush2.bf16.msra.mxu0 %v954
    %1344 = vmatprep.subr.bf16.mxu0 %v951
    %1345 = vmatpush2.bf16.msra.mxu0 %v950
    %1346 = vmatprep.mubr.bf16.mxu0 %v106
    %1347 = vmatmul.mubr.bf16.gmra.mxu0 %v105
    %v1348 = vpop.f32.mrf.mxu0
    %v1349 = vadd.f32 %v313, %v1348
    %v1350 = vpop.f32.mrf.mxu0
    %v1351 = vadd.f32 %v317, %v1350
    %v1352 = vpop.f32.mrf.mxu0
    %v1353 = vpop.f32.mrf.mxu0
    %1354 = vdwg.mxu0
    %1355 = vmatprep.subr.bf16.mxu0 %v1011
    %1356 = vmatpush1.bf16.msra.mxu0 %v1010
    %1357 = vmatprep.subr.bf16.mxu0 %v1007
    %1358 = vmatpush1.bf16.msra.mxu0 %v1006
    %1359 = vmatprep.subr.bf16.mxu0 %v1003
    %1360 = vmatpush1.bf16.msra.mxu0 %v1002
    %1361 = vmatprep.subr.bf16.mxu0 %v999
    %1362 = vmatpush1.bf16.msra.mxu0 %v998
    %1363 = vmatprep.subr.bf16.mxu0 %v995
    %1364 = vmatpush1.bf16.msra.mxu0 %v994
    %1365 = vmatprep.subr.bf16.mxu0 %v991
    %1366 = vmatpush1.bf16.msra.mxu0 %v990
    %1367 = vmatprep.subr.bf16.mxu0 %v987
    %1368 = vmatpush1.bf16.msra.mxu0 %v986
    %1369 = vmatprep.subr.bf16.mxu0 %v983
    %1370 = vmatpush1.bf16.msra.mxu0 %v982
    %1371 = vmatprep.subr.bf16.mxu0 %v1043
    %1372 = vmatpush2.bf16.msra.mxu0 %v1042
    %1373 = vmatprep.subr.bf16.mxu0 %v1039
    %1374 = vmatpush2.bf16.msra.mxu0 %v1038
    %1375 = vmatprep.subr.bf16.mxu0 %v1035
    %1376 = vmatpush2.bf16.msra.mxu0 %v1034
    %1377 = vmatprep.subr.bf16.mxu0 %v1031
    %1378 = vmatpush2.bf16.msra.mxu0 %v1030
    %1379 = vmatprep.subr.bf16.mxu0 %v1027
    %1380 = vmatpush2.bf16.msra.mxu0 %v1026
    %1381 = vmatprep.subr.bf16.mxu0 %v1023
    %1382 = vmatpush2.bf16.msra.mxu0 %v1022
    %1383 = vmatprep.subr.bf16.mxu0 %v1019
    %1384 = vmatpush2.bf16.msra.mxu0 %v1018
    %1385 = vmatprep.subr.bf16.mxu0 %v1015
    %1386 = vmatpush2.bf16.msra.mxu0 %v1014
    %1387 = vmatprep.mubr.bf16.mxu0 %v108
    %1388 = vmatmul.mubr.bf16.gmra.mxu0 %v107
    %v1389 = vpop.f32.mrf.mxu0
    %v1390 = vadd.f32 %v1349, %v1389
    %v1391 = vpop.f32.mrf.mxu0
    %v1392 = vadd.f32 %v1351, %v1391
    %v1393 = vpop.f32.mrf.mxu0
    %v1394 = vpop.f32.mrf.mxu0
    %1395 = vdwg.mxu0
    %1396 = vmatprep.subr.bf16.mxu0 %v1075
    %1397 = vmatpush1.bf16.msra.mxu0 %v1074
    %1398 = vmatprep.subr.bf16.mxu0 %v1071
    %1399 = vmatpush1.bf16.msra.mxu0 %v1070
    %1400 = vmatprep.subr.bf16.mxu0 %v1067
    %1401 = vmatpush1.bf16.msra.mxu0 %v1066
    %1402 = vmatprep.subr.bf16.mxu0 %v1063
    %1403 = vmatpush1.bf16.msra.mxu0 %v1062
    %1404 = vmatprep.subr.bf16.mxu0 %v1059
    %1405 = vmatpush1.bf16.msra.mxu0 %v1058
    %1406 = vmatprep.subr.bf16.mxu0 %v1055
    %1407 = vmatpush1.bf16.msra.mxu0 %v1054
    %1408 = vmatprep.subr.bf16.mxu0 %v1051
    %1409 = vmatpush1.bf16.msra.mxu0 %v1050
    %1410 = vmatprep.subr.bf16.mxu0 %v1047
    %1411 = vmatpush1.bf16.msra.mxu0 %v1046
    %1412 = vmatprep.subr.bf16.mxu0 %v1107
    %1413 = vmatpush2.bf16.msra.mxu0 %v1106
    %1414 = vmatprep.subr.bf16.mxu0 %v1103
    %1415 = vmatpush2.bf16.msra.mxu0 %v1102
    %1416 = vmatprep.subr.bf16.mxu0 %v1099
    %1417 = vmatpush2.bf16.msra.mxu0 %v1098
    %1418 = vmatprep.subr.bf16.mxu0 %v1095
    %1419 = vmatpush2.bf16.msra.mxu0 %v1094
    %1420 = vmatprep.subr.bf16.mxu0 %v1091
    %1421 = vmatpush2.bf16.msra.mxu0 %v1090
    %1422 = vmatprep.subr.bf16.mxu0 %v1087
    %1423 = vmatpush2.bf16.msra.mxu0 %v1086
    %1424 = vmatprep.subr.bf16.mxu0 %v1083
    %1425 = vmatpush2.bf16.msra.mxu0 %v1082
    %1426 = vmatprep.subr.bf16.mxu0 %v1079
    %1427 = vmatpush2.bf16.msra.mxu0 %v1078
    %1428 = vmatprep.mubr.bf16.mxu0 %v110
    %1429 = vmatmul.mubr.bf16.gmra.mxu0 %v109
    %v1430 = vpop.f32.mrf.mxu0
    %v1431 = vadd.f32 %v1390, %v1430
    %v1432 = vpop.f32.mrf.mxu0
    %v1433 = vadd.f32 %v1392, %v1432
    %v1434 = vpop.f32.mrf.mxu0
    %v1435 = vpop.f32.mrf.mxu0
    %1436 = vdwg.mxu0
    %1437 = vmatprep.subr.bf16.mxu0 0
    %1438 = vmatpush1.bf16.msra.mxu0 0
    %1439 = vmatprep.subr.bf16.mxu0 0
    %1440 = vmatpush1.bf16.msra.mxu0 0
    %1441 = vmatprep.subr.bf16.mxu0 0
    %1442 = vmatpush1.bf16.msra.mxu0 0
    %1443 = vmatprep.subr.bf16.mxu0 0
    %1444 = vmatpush1.bf16.msra.mxu0 0
    %1445 = vmatprep.subr.bf16.mxu0 0
    %1446 = vmatpush1.bf16.msra.mxu0 0
    %1447 = vmatprep.subr.bf16.mxu0 0
    %1448 = vmatpush1.bf16.msra.mxu0 0
    %1449 = vmatprep.subr.bf16.mxu0 0
    %1450 = vmatpush1.bf16.msra.mxu0 0
    %1451 = vmatprep.subr.bf16.mxu0 %v1111
    %1452 = vmatpush1.bf16.msra.mxu0 %v1110
    %1453 = vmatprep.subr.bf16.mxu0 0
    %1454 = vmatpush2.bf16.msra.mxu0 0
    %1455 = vmatprep.subr.bf16.mxu0 0
    %1456 = vmatpush2.bf16.msra.mxu0 0
    %1457 = vmatprep.subr.bf16.mxu0 0
    %1458 = vmatpush2.bf16.msra.mxu0 0
    %1459 = vmatprep.subr.bf16.mxu0 0
    %1460 = vmatpush2.bf16.msra.mxu0 0
    %1461 = vmatprep.subr.bf16.mxu0 0
    %1462 = vmatpush2.bf16.msra.mxu0 0
    %1463 = vmatprep.subr.bf16.mxu0 0
    %1464 = vmatpush2.bf16.msra.mxu0 0
    %1465 = vmatprep.subr.bf16.mxu0 0
    %1466 = vmatpush2.bf16.msra.mxu0 0
    %1467 = vmatprep.subr.bf16.mxu0 0
    %1468 = vmatpush2.bf16.msra.mxu0 0
    %1469 = vmatprep.mubr.bf16.mxu0 0
    %1470 = vmatmul.mubr.bf16.gmra.mxu0 %v1312
    %v1471 = vpop.f32.mrf.mxu0
    %v1472 = vadd.f32 %v1431, %v1471
    %v1473 = vpop.f32.mrf.mxu0
    %v1474 = vadd.f32 %v1433, %v1473
    %v1475 = vpop.f32.mrf.mxu0
    %v1476 = vpop.f32.mrf.mxu0
    %1477 = vdwg.mxu0
    %1478 = vmatprep.subr.bf16.mxu0 %v949
    %1479 = vmatpush1.bf16.msra.mxu0 %v948
    %1480 = vmatprep.subr.bf16.mxu0 %v945
    %1481 = vmatpush1.bf16.msra.mxu0 %v944
    %1482 = vmatprep.subr.bf16.mxu0 %v941
    %1483 = vmatpush1.bf16.msra.mxu0 %v940
    %1484 = vmatprep.subr.bf16.mxu0 %v937
    %1485 = vmatpush1.bf16.msra.mxu0 %v936
    %1486 = vmatprep.subr.bf16.mxu0 %v933
    %1487 = vmatpush1.bf16.msra.mxu0 %v932
    %1488 = vmatprep.subr.bf16.mxu0 %v929
    %1489 = vmatpush1.bf16.msra.mxu0 %v928
    %1490 = vmatprep.subr.bf16.mxu0 %v925
    %1491 = vmatpush1.bf16.msra.mxu0 %v924
    %1492 = vmatprep.subr.bf16.mxu0 %v921
    %1493 = vmatpush1.bf16.msra.mxu0 %v920
    %1494 = vmatprep.subr.bf16.mxu0 %v981
    %1495 = vmatpush2.bf16.msra.mxu0 %v980
    %1496 = vmatprep.subr.bf16.mxu0 %v977
    %1497 = vmatpush2.bf16.msra.mxu0 %v976
    %1498 = vmatprep.subr.bf16.mxu0 %v973
    %1499 = vmatpush2.bf16.msra.mxu0 %v972
    %1500 = vmatprep.subr.bf16.mxu0 %v969
    %1501 = vmatpush2.bf16.msra.mxu0 %v968
    %1502 = vmatprep.subr.bf16.mxu0 %v965
    %1503 = vmatpush2.bf16.msra.mxu0 %v964
    %1504 = vmatprep.subr.bf16.mxu0 %v961
    %1505 = vmatpush2.bf16.msra.mxu0 %v960
    %1506 = vmatprep.subr.bf16.mxu0 %v957
    %1507 = vmatpush2.bf16.msra.mxu0 %v956
    %1508 = vmatprep.subr.bf16.mxu0 %v953
    %1509 = vmatpush2.bf16.msra.mxu0 %v952
    %1510 = vmatprep.mubr.bf16.mxu0 %v106
    %1511 = vmatmul.mubr.bf16.gmra.mxu0 %v105
    %v1512 = vpop.f32.mrf.mxu0
    %v1513 = vadd.f32 %v321, %v1512
    %v1514 = vpop.f32.mrf.mxu0
    %v1515 = vadd.f32 %v325, %v1514
    %v1516 = vpop.f32.mrf.mxu0
    %v1517 = vpop.f32.mrf.mxu0
    %1518 = vdwg.mxu0
    %1519 = vmatprep.subr.bf16.mxu0 %v1013
    %1520 = vmatpush1.bf16.msra.mxu0 %v1012
    %1521 = vmatprep.subr.bf16.mxu0 %v1009
    %1522 = vmatpush1.bf16.msra.mxu0 %v1008
    %1523 = vmatprep.subr.bf16.mxu0 %v1005
    %1524 = vmatpush1.bf16.msra.mxu0 %v1004
    %1525 = vmatprep.subr.bf16.mxu0 %v1001
    %1526 = vmatpush1.bf16.msra.mxu0 %v1000
    %1527 = vmatprep.subr.bf16.mxu0 %v997
    %1528 = vmatpush1.bf16.msra.mxu0 %v996
    %1529 = vmatprep.subr.bf16.mxu0 %v993
    %1530 = vmatpush1.bf16.msra.mxu0 %v992
    %1531 = vmatprep.subr.bf16.mxu0 %v989
    %1532 = vmatpush1.bf16.msra.mxu0 %v988
    %1533 = vmatprep.subr.bf16.mxu0 %v985
    %1534 = vmatpush1.bf16.msra.mxu0 %v984
    %1535 = vmatprep.subr.bf16.mxu0 %v1045
    %1536 = vmatpush2.bf16.msra.mxu0 %v1044
    %1537 = vmatprep.subr.bf16.mxu0 %v1041
    %1538 = vmatpush2.bf16.msra.mxu0 %v1040
    %1539 = vmatprep.subr.bf16.mxu0 %v1037
    %1540 = vmatpush2.bf16.msra.mxu0 %v1036
    %1541 = vmatprep.subr.bf16.mxu0 %v1033
    %1542 = vmatpush2.bf16.msra.mxu0 %v1032
    %1543 = vmatprep.subr.bf16.mxu0 %v1029
    %1544 = vmatpush2.bf16.msra.mxu0 %v1028
    %1545 = vmatprep.subr.bf16.mxu0 %v1025
    %1546 = vmatpush2.bf16.msra.mxu0 %v1024
    %1547 = vmatprep.subr.bf16.mxu0 %v1021
    %1548 = vmatpush2.bf16.msra.mxu0 %v1020
    %1549 = vmatprep.subr.bf16.mxu0 %v1017
    %1550 = vmatpush2.bf16.msra.mxu0 %v1016
    %1551 = vmatprep.mubr.bf16.mxu0 %v108
    %1552 = vmatmul.mubr.bf16.gmra.mxu0 %v107
    %v1553 = vpop.f32.mrf.mxu0
    %v1554 = vadd.f32 %v1513, %v1553
    %v1555 = vpop.f32.mrf.mxu0
    %v1556 = vadd.f32 %v1515, %v1555
    %v1557 = vpop.f32.mrf.mxu0
    %v1558 = vpop.f32.mrf.mxu0
    %1559 = vdwg.mxu0
    %1560 = vmatprep.subr.bf16.mxu0 %v1077
    %1561 = vmatpush1.bf16.msra.mxu0 %v1076
    %1562 = vmatprep.subr.bf16.mxu0 %v1073
    %1563 = vmatpush1.bf16.msra.mxu0 %v1072
    %1564 = vmatprep.subr.bf16.mxu0 %v1069
    %1565 = vmatpush1.bf16.msra.mxu0 %v1068
    %1566 = vmatprep.subr.bf16.mxu0 %v1065
    %1567 = vmatpush1.bf16.msra.mxu0 %v1064
    %1568 = vmatprep.subr.bf16.mxu0 %v1061
    %1569 = vmatpush1.bf16.msra.mxu0 %v1060
    %1570 = vmatprep.subr.bf16.mxu0 %v1057
    %1571 = vmatpush1.bf16.msra.mxu0 %v1056
    %1572 = vmatprep.subr.bf16.mxu0 %v1053
    %1573 = vmatpush1.bf16.msra.mxu0 %v1052
    %1574 = vmatprep.subr.bf16.mxu0 %v1049
    %1575 = vmatpush1.bf16.msra.mxu0 %v1048
    %1576 = vmatprep.subr.bf16.mxu0 %v1109
    %1577 = vmatpush2.bf16.msra.mxu0 %v1108
    %1578 = vmatprep.subr.bf16.mxu0 %v1105
    %1579 = vmatpush2.bf16.msra.mxu0 %v1104
    %1580 = vmatprep.subr.bf16.mxu0 %v1101
    %1581 = vmatpush2.bf16.msra.mxu0 %v1100
    %1582 = vmatprep.subr.bf16.mxu0 %v1097
    %1583 = vmatpush2.bf16.msra.mxu0 %v1096
    %1584 = vmatprep.subr.bf16.mxu0 %v1093
    %1585 = vmatpush2.bf16.msra.mxu0 %v1092
    %1586 = vmatprep.subr.bf16.mxu0 %v1089
    %1587 = vmatpush2.bf16.msra.mxu0 %v1088
    %1588 = vmatprep.subr.bf16.mxu0 %v1085
    %1589 = vmatpush2.bf16.msra.mxu0 %v1084
    %1590 = vmatprep.subr.bf16.mxu0 %v1081
    %1591 = vmatpush2.bf16.msra.mxu0 %v1080
    %1592 = vmatprep.mubr.bf16.mxu0 %v110
    %1593 = vmatmul.mubr.bf16.gmra.mxu0 %v109
    %v1594 = vpop.f32.mrf.mxu0
    %v1595 = vadd.f32 %v1554, %v1594
    %v1596 = vpop.f32.mrf.mxu0
    %v1597 = vadd.f32 %v1556, %v1596
    %v1598 = vpop.f32.mrf.mxu0
    %v1599 = vpop.f32.mrf.mxu0
    %1600 = vdwg.mxu0
    %1601 = vmatprep.subr.bf16.mxu0 0
    %1602 = vmatpush1.bf16.msra.mxu0 0
    %1603 = vmatprep.subr.bf16.mxu0 0
    %1604 = vmatpush1.bf16.msra.mxu0 0
    %1605 = vmatprep.subr.bf16.mxu0 0
    %1606 = vmatpush1.bf16.msra.mxu0 0
    %1607 = vmatprep.subr.bf16.mxu0 0
    %1608 = vmatpush1.bf16.msra.mxu0 0
    %1609 = vmatprep.subr.bf16.mxu0 0
    %1610 = vmatpush1.bf16.msra.mxu0 0
    %1611 = vmatprep.subr.bf16.mxu0 0
    %1612 = vmatpush1.bf16.msra.mxu0 0
    %1613 = vmatprep.subr.bf16.mxu0 0
    %1614 = vmatpush1.bf16.msra.mxu0 0
    %1615 = vmatprep.subr.bf16.mxu0 %v1113
    %1616 = vmatpush1.bf16.msra.mxu0 %v1112
    %1617 = vmatprep.subr.bf16.mxu0 0
    %1618 = vmatpush2.bf16.msra.mxu0 0
    %1619 = vmatprep.subr.bf16.mxu0 0
    %1620 = vmatpush2.bf16.msra.mxu0 0
    %1621 = vmatprep.subr.bf16.mxu0 0
    %1622 = vmatpush2.bf16.msra.mxu0 0
    %1623 = vmatprep.subr.bf16.mxu0 0
    %1624 = vmatpush2.bf16.msra.mxu0 0
    %1625 = vmatprep.subr.bf16.mxu0 0
    %1626 = vmatpush2.bf16.msra.mxu0 0
    %1627 = vmatprep.subr.bf16.mxu0 0
    %1628 = vmatpush2.bf16.msra.mxu0 0
    %1629 = vmatprep.subr.bf16.mxu0 0
    %1630 = vmatpush2.bf16.msra.mxu0 0
    %1631 = vmatprep.subr.bf16.mxu0 0
    %1632 = vmatpush2.bf16.msra.mxu0 0
    %1633 = vmatprep.mubr.bf16.mxu0 0
    %1634 = vmatmul.mubr.bf16.gmra.mxu0 %v1312
    %v1635 = vpop.f32.mrf.mxu0
    %v1636 = vadd.f32 %v1595, %v1635
    %v1637 = vpop.f32.mrf.mxu0
    %v1638 = vadd.f32 %v1597, %v1637
    %v1639 = vpop.f32.mrf.mxu0
    %v1640 = vpop.f32.mrf.mxu0
    %1641 = vdwg.mxu0
    %v1642 = vmax.f32 %v1472, 0.0
    %v1643 = vmax.f32 %v1474, 0.0
    %v1644 = vmax.f32 %v1636, 0.0
    %v1645 = vmax.f32 %v1638, 0.0
    %v1646 = vpack.c.bf16 %v1642, %v1642
    %v1647 = vpack.c.bf16 %v1643, %v1643
    %v1648 = vpack.c.bf16 %v1644, %v1644
    %v1649 = vpack.c.bf16 %v1645, %v1645
    %v1650 = vld [vmem:[#allocation8] sm:$0xff]
    %v1651 = vld [vmem:[#allocation8 + $0x8] sm:$0xff]
    %v1652 = vld [vmem:[#allocation8 + $0x10] sm:$0xff]
    %v1653 = vld [vmem:[#allocation8 + $0x18] sm:$0xff]
    %v1654 = vld [vmem:[#allocation8 + $0x20] sm:$0xff]
    %v1655 = vld [vmem:[#allocation8 + $0x28] sm:$0xff]
    %v1656 = vld [vmem:[#allocation8 + $0x30] sm:$0xff]
    %v1657 = vld [vmem:[#allocation8 + $0x38] sm:$0xff]
    %v1658 = vld [vmem:[#allocation8 + $0x40] sm:$0xff]
    %v1659 = vld [vmem:[#allocation8 + $0x48] sm:$0xff]
    %v1660 = vld [vmem:[#allocation8 + $0x50] sm:$0xff]
    %v1661 = vld [vmem:[#allocation8 + $0x58] sm:$0xff]
    %v1662 = vld [vmem:[#allocation8 + $0x60] sm:$0xff]
    %v1663 = vld [vmem:[#allocation8 + $0x68] sm:$0xff]
    %v1664 = vld [vmem:[#allocation8 + $0x70] sm:$0xff]
    %v1665 = vld [vmem:[#allocation8 + $0x78] sm:$0xff]
    %v1666 = vld [vmem:[#allocation8 + $0x80] sm:$0xff]
    %v1667 = vld [vmem:[#allocation8 + $0x88] sm:$0xff]
    %v1668 = vld [vmem:[#allocation8 + $0x90] sm:$0xff]
    %v1669 = vld [vmem:[#allocation8 + $0x98] sm:$0xff]
    %v1670 = vld [vmem:[#allocation8 + $0xa0] sm:$0xff]
    %v1671 = vld [vmem:[#allocation8 + $0xa8] sm:$0xff]
    %v1672 = vld [vmem:[#allocation8 + $0xb0] sm:$0xff]
    %v1673 = vld [vmem:[#allocation8 + $0xb8] sm:$0xff]
    %v1674 = vld [vmem:[#allocation8 + $0xc0] sm:$0xff]
    %v1675 = vld [vmem:[#allocation8 + $0xc8] sm:$0xff]
    %v1676 = vld [vmem:[#allocation8 + $0xd0] sm:$0xff]
    %v1677 = vld [vmem:[#allocation8 + $0xd8] sm:$0xff]
    %v1678 = vld [vmem:[#allocation8 + $0xe0] sm:$0xff]
    %v1679 = vld [vmem:[#allocation8 + $0xe8] sm:$0xff]
    %v1680 = vld [vmem:[#allocation8 + $0xf0] sm:$0xff]
    %v1681 = vld [vmem:[#allocation8 + $0xf8] sm:$0xff]
    %v1682 = vld [vmem:[#allocation8 + $0x100] sm:$0xff]
    %v1683 = vld [vmem:[#allocation8 + $0x108] sm:$0xff]
    %v1684 = vld [vmem:[#allocation8 + $0x110] sm:$0xff]
    %v1685 = vld [vmem:[#allocation8 + $0x118] sm:$0xff]
    %v1686 = vld [vmem:[#allocation8 + $0x120] sm:$0xff]
    %v1687 = vld [vmem:[#allocation8 + $0x128] sm:$0xff]
    %v1688 = vld [vmem:[#allocation8 + $0x130] sm:$0xff]
    %v1689 = vld [vmem:[#allocation8 + $0x138] sm:$0xff]
    %v1690 = vld [vmem:[#allocation8 + $0x140] sm:$0xff]
    %v1691 = vld [vmem:[#allocation8 + $0x148] sm:$0xff]
    %v1692 = vld [vmem:[#allocation8 + $0x150] sm:$0xff]
    %v1693 = vld [vmem:[#allocation8 + $0x158] sm:$0xff]
    %v1694 = vld [vmem:[#allocation8 + $0x160] sm:$0xff]
    %v1695 = vld [vmem:[#allocation8 + $0x168] sm:$0xff]
    %v1696 = vld [vmem:[#allocation8 + $0x170] sm:$0xff]
    %v1697 = vld [vmem:[#allocation8 + $0x178] sm:$0xff]
    %v1698 = vld [vmem:[#allocation8 + $0x180] sm:$0xff]
    %v1699 = vld [vmem:[#allocation8 + $0x188] sm:$0xff]
    %v1700 = vld [vmem:[#allocation8 + $0x190] sm:$0xff]
    %v1701 = vld [vmem:[#allocation8 + $0x198] sm:$0xff]
    %v1702 = vld [vmem:[#allocation8 + $0x1a0] sm:$0xff]
    %v1703 = vld [vmem:[#allocation8 + $0x1a8] sm:$0xff]
    %v1704 = vld [vmem:[#allocation8 + $0x1b0] sm:$0xff]
    %v1705 = vld [vmem:[#allocation8 + $0x1b8] sm:$0xff]
    %v1706 = vld [vmem:[#allocation8 + $0x1c0] sm:$0xff]
    %v1707 = vld [vmem:[#allocation8 + $0x1c8] sm:$0xff]
    %v1708 = vld [vmem:[#allocation8 + $0x1d0] sm:$0xff]
    %v1709 = vld [vmem:[#allocation8 + $0x1d8] sm:$0xff]
    %v1710 = vld [vmem:[#allocation8 + $0x1e0] sm:$0xff]
    %v1711 = vld [vmem:[#allocation8 + $0x1e8] sm:$0xff]
    %v1712 = vld [vmem:[#allocation8 + $0x1f0] sm:$0xff]
    %v1713 = vld [vmem:[#allocation8 + $0x1f8] sm:$0xff]
    %v1714 = vld [vmem:[%s4] sm:$0x3]
    %v1716 = vlaneseq
    %v1717 = vshrl.u32 %v1716, 7
    %v1718 = vsub.s32 0, %v1717
    %v1719 = vrot.slane %v1714, %v1718
    %v1720 = vlaneseq
    %v1721 = vshrl.u32 %v1720, 7
    %v1722 = vsub.s32 1, %v1721
    %v1723 = vrot.slane %v1714, %v1722
    %v1790 = vunpack.c.l.b16 %v1650
    %v1791 = vunpack.c.h.b16 %v1650
    %v1792 = vunpack.c.l.b16 %v1651
    %v1793 = vunpack.c.h.b16 %v1651
    %v1794 = vunpack.c.l.b16 %v1652
    %v1795 = vunpack.c.h.b16 %v1652
    %v1796 = vunpack.c.l.b16 %v1653
    %v1797 = vunpack.c.h.b16 %v1653
    %v1798 = vunpack.c.l.b16 %v1654
    %v1799 = vunpack.c.h.b16 %v1654
    %v1800 = vunpack.c.l.b16 %v1655
    %v1801 = vunpack.c.h.b16 %v1655
    %v1802 = vunpack.c.l.b16 %v1656
    %v1803 = vunpack.c.h.b16 %v1656
    %v1804 = vunpack.c.l.b16 %v1657
    %v1805 = vunpack.c.h.b16 %v1657
    %v1806 = vunpack.c.l.b16 %v1658
    %v1807 = vunpack.c.h.b16 %v1658
    %v1808 = vunpack.c.l.b16 %v1659
    %v1809 = vunpack.c.h.b16 %v1659
    %v1810 = vunpack.c.l.b16 %v1660
    %v1811 = vunpack.c.h.b16 %v1660
    %v1812 = vunpack.c.l.b16 %v1661
    %v1813 = vunpack.c.h.b16 %v1661
    %v1814 = vunpack.c.l.b16 %v1662
    %v1815 = vunpack.c.h.b16 %v1662
    %v1816 = vunpack.c.l.b16 %v1663
    %v1817 = vunpack.c.h.b16 %v1663
    %v1818 = vunpack.c.l.b16 %v1664
    %v1819 = vunpack.c.h.b16 %v1664
    %v1820 = vunpack.c.l.b16 %v1665
    %v1821 = vunpack.c.h.b16 %v1665
    %v1822 = vunpack.c.l.b16 %v1666
    %v1823 = vunpack.c.h.b16 %v1666
    %v1824 = vunpack.c.l.b16 %v1667
    %v1825 = vunpack.c.h.b16 %v1667
    %v1826 = vunpack.c.l.b16 %v1668
    %v1827 = vunpack.c.h.b16 %v1668
    %v1828 = vunpack.c.l.b16 %v1669
    %v1829 = vunpack.c.h.b16 %v1669
    %v1830 = vunpack.c.l.b16 %v1670
    %v1831 = vunpack.c.h.b16 %v1670
    %v1832 = vunpack.c.l.b16 %v1671
    %v1833 = vunpack.c.h.b16 %v1671
    %v1834 = vunpack.c.l.b16 %v1672
    %v1835 = vunpack.c.h.b16 %v1672
    %v1836 = vunpack.c.l.b16 %v1673
    %v1837 = vunpack.c.h.b16 %v1673
    %v1838 = vunpack.c.l.b16 %v1674
    %v1839 = vunpack.c.h.b16 %v1674
    %v1840 = vunpack.c.l.b16 %v1675
    %v1841 = vunpack.c.h.b16 %v1675
    %v1842 = vunpack.c.l.b16 %v1676
    %v1843 = vunpack.c.h.b16 %v1676
    %v1844 = vunpack.c.l.b16 %v1677
    %v1845 = vunpack.c.h.b16 %v1677
    %v1846 = vunpack.c.l.b16 %v1678
    %v1847 = vunpack.c.h.b16 %v1678
    %v1848 = vunpack.c.l.b16 %v1679
    %v1849 = vunpack.c.h.b16 %v1679
    %v1850 = vunpack.c.l.b16 %v1680
    %v1851 = vunpack.c.h.b16 %v1680
    %v1852 = vunpack.c.l.b16 %v1681
    %v1853 = vunpack.c.h.b16 %v1681
    %v1854 = vunpack.c.l.b16 %v1682
    %v1855 = vunpack.c.h.b16 %v1682
    %v1856 = vunpack.c.l.b16 %v1683
    %v1857 = vunpack.c.h.b16 %v1683
    %v1858 = vunpack.c.l.b16 %v1684
    %v1859 = vunpack.c.h.b16 %v1684
    %v1860 = vunpack.c.l.b16 %v1685
    %v1861 = vunpack.c.h.b16 %v1685
    %v1862 = vunpack.c.l.b16 %v1686
    %v1863 = vunpack.c.h.b16 %v1686
    %v1864 = vunpack.c.l.b16 %v1687
    %v1865 = vunpack.c.h.b16 %v1687
    %v1866 = vunpack.c.l.b16 %v1688
    %v1867 = vunpack.c.h.b16 %v1688
    %v1868 = vunpack.c.l.b16 %v1689
    %v1869 = vunpack.c.h.b16 %v1689
    %v1870 = vunpack.c.l.b16 %v1690
    %v1871 = vunpack.c.h.b16 %v1690
    %v1872 = vunpack.c.l.b16 %v1691
    %v1873 = vunpack.c.h.b16 %v1691
    %v1874 = vunpack.c.l.b16 %v1692
    %v1875 = vunpack.c.h.b16 %v1692
    %v1876 = vunpack.c.l.b16 %v1693
    %v1877 = vunpack.c.h.b16 %v1693
    %v1878 = vunpack.c.l.b16 %v1694
    %v1879 = vunpack.c.h.b16 %v1694
    %v1880 = vunpack.c.l.b16 %v1695
    %v1881 = vunpack.c.h.b16 %v1695
    %v1882 = vunpack.c.l.b16 %v1696
    %v1883 = vunpack.c.h.b16 %v1696
    %v1884 = vunpack.c.l.b16 %v1697
    %v1885 = vunpack.c.h.b16 %v1697
    %v1886 = vunpack.c.l.b16 %v1698
    %v1887 = vunpack.c.h.b16 %v1698
    %v1888 = vunpack.c.l.b16 %v1699
    %v1889 = vunpack.c.h.b16 %v1699
    %v1890 = vunpack.c.l.b16 %v1700
    %v1891 = vunpack.c.h.b16 %v1700
    %v1892 = vunpack.c.l.b16 %v1701
    %v1893 = vunpack.c.h.b16 %v1701
    %v1894 = vunpack.c.l.b16 %v1702
    %v1895 = vunpack.c.h.b16 %v1702
    %v1896 = vunpack.c.l.b16 %v1703
    %v1897 = vunpack.c.h.b16 %v1703
    %v1898 = vunpack.c.l.b16 %v1704
    %v1899 = vunpack.c.h.b16 %v1704
    %v1900 = vunpack.c.l.b16 %v1705
    %v1901 = vunpack.c.h.b16 %v1705
    %v1902 = vunpack.c.l.b16 %v1706
    %v1903 = vunpack.c.h.b16 %v1706
    %v1904 = vunpack.c.l.b16 %v1707
    %v1905 = vunpack.c.h.b16 %v1707
    %v1906 = vunpack.c.l.b16 %v1708
    %v1907 = vunpack.c.h.b16 %v1708
    %v1908 = vunpack.c.l.b16 %v1709
    %v1909 = vunpack.c.h.b16 %v1709
    %v1910 = vunpack.c.l.b16 %v1710
    %v1911 = vunpack.c.h.b16 %v1710
    %v1912 = vunpack.c.l.b16 %v1711
    %v1913 = vunpack.c.h.b16 %v1711
    %v1914 = vunpack.c.l.b16 %v1712
    %v1915 = vunpack.c.h.b16 %v1712
    %v1916 = vunpack.c.l.b16 %v1713
    %v1917 = vunpack.c.h.b16 %v1713
    %v1918 = vpack.c.b16 %v1792, %v1790
    %v1919 = vpack.c.b16 %v1793, %v1791
    %v1920 = vpack.c.b16 %v1796, %v1794
    %v1921 = vpack.c.b16 %v1797, %v1795
    %v1922 = vpack.c.b16 %v1800, %v1798
    %v1923 = vpack.c.b16 %v1801, %v1799
    %v1924 = vpack.c.b16 %v1804, %v1802
    %v1925 = vpack.c.b16 %v1805, %v1803
    %v1926 = vpack.c.b16 %v1808, %v1806
    %v1927 = vpack.c.b16 %v1809, %v1807
    %v1928 = vpack.c.b16 %v1812, %v1810
    %v1929 = vpack.c.b16 %v1813, %v1811
    %v1930 = vpack.c.b16 %v1816, %v1814
    %v1931 = vpack.c.b16 %v1817, %v1815
    %v1932 = vpack.c.b16 %v1820, %v1818
    %v1933 = vpack.c.b16 %v1821, %v1819
    %v1934 = vpack.c.b16 %v1824, %v1822
    %v1935 = vpack.c.b16 %v1825, %v1823
    %v1936 = vpack.c.b16 %v1828, %v1826
    %v1937 = vpack.c.b16 %v1829, %v1827
    %v1938 = vpack.c.b16 %v1832, %v1830
    %v1939 = vpack.c.b16 %v1833, %v1831
    %v1940 = vpack.c.b16 %v1836, %v1834
    %v1941 = vpack.c.b16 %v1837, %v1835
    %v1942 = vpack.c.b16 %v1840, %v1838
    %v1943 = vpack.c.b16 %v1841, %v1839
    %v1944 = vpack.c.b16 %v1844, %v1842
    %v1945 = vpack.c.b16 %v1845, %v1843
    %v1946 = vpack.c.b16 %v1848, %v1846
    %v1947 = vpack.c.b16 %v1849, %v1847
    %v1948 = vpack.c.b16 %v1852, %v1850
    %v1949 = vpack.c.b16 %v1853, %v1851
    %v1950 = vpack.c.b16 %v1856, %v1854
    %v1951 = vpack.c.b16 %v1857, %v1855
    %v1952 = vpack.c.b16 %v1860, %v1858
    %v1953 = vpack.c.b16 %v1861, %v1859
    %v1954 = vpack.c.b16 %v1864, %v1862
    %v1955 = vpack.c.b16 %v1865, %v1863
    %v1956 = vpack.c.b16 %v1868, %v1866
    %v1957 = vpack.c.b16 %v1869, %v1867
    %v1958 = vpack.c.b16 %v1872, %v1870
    %v1959 = vpack.c.b16 %v1873, %v1871
    %v1960 = vpack.c.b16 %v1876, %v1874
    %v1961 = vpack.c.b16 %v1877, %v1875
    %v1962 = vpack.c.b16 %v1880, %v1878
    %v1963 = vpack.c.b16 %v1881, %v1879
    %v1964 = vpack.c.b16 %v1884, %v1882
    %v1965 = vpack.c.b16 %v1885, %v1883
    %v1966 = vpack.c.b16 %v1888, %v1886
    %v1967 = vpack.c.b16 %v1889, %v1887
    %v1968 = vpack.c.b16 %v1892, %v1890
    %v1969 = vpack.c.b16 %v1893, %v1891
    %v1970 = vpack.c.b16 %v1896, %v1894
    %v1971 = vpack.c.b16 %v1897, %v1895
    %v1972 = vpack.c.b16 %v1900, %v1898
    %v1973 = vpack.c.b16 %v1901, %v1899
    %v1974 = vpack.c.b16 %v1904, %v1902
    %v1975 = vpack.c.b16 %v1905, %v1903
    %v1976 = vpack.c.b16 %v1908, %v1906
    %v1977 = vpack.c.b16 %v1909, %v1907
    %v1978 = vpack.c.b16 %v1912, %v1910
    %v1979 = vpack.c.b16 %v1913, %v1911
    %v1980 = vpack.c.b16 %v1916, %v1914
    %v1981 = vpack.c.b16 %v1917, %v1915
    %2046 = vmatprep.subr.bf16.mxu0 %v1933
    %2047 = vmatpush1.bf16.msra.mxu0 %v1932
    %2048 = vmatprep.subr.bf16.mxu0 %v1931
    %2049 = vmatpush1.bf16.msra.mxu0 %v1930
    %2050 = vmatprep.subr.bf16.mxu0 %v1929
    %2051 = vmatpush1.bf16.msra.mxu0 %v1928
    %2052 = vmatprep.subr.bf16.mxu0 %v1927
    %2053 = vmatpush1.bf16.msra.mxu0 %v1926
    %2054 = vmatprep.subr.bf16.mxu0 %v1925
    %2055 = vmatpush1.bf16.msra.mxu0 %v1924
    %2056 = vmatprep.subr.bf16.mxu0 %v1923
    %2057 = vmatpush1.bf16.msra.mxu0 %v1922
    %2058 = vmatprep.subr.bf16.mxu0 %v1921
    %2059 = vmatpush1.bf16.msra.mxu0 %v1920
    %2060 = vmatprep.subr.bf16.mxu0 %v1919
    %2061 = vmatpush1.bf16.msra.mxu0 %v1918
    %2062 = vmatprep.subr.bf16.mxu0 %v1949
    %2063 = vmatpush2.bf16.msra.mxu0 %v1948
    %2064 = vmatprep.subr.bf16.mxu0 %v1947
    %2065 = vmatpush2.bf16.msra.mxu0 %v1946
    %2066 = vmatprep.subr.bf16.mxu0 %v1945
    %2067 = vmatpush2.bf16.msra.mxu0 %v1944
    %2068 = vmatprep.subr.bf16.mxu0 %v1943
    %2069 = vmatpush2.bf16.msra.mxu0 %v1942
    %2070 = vmatprep.subr.bf16.mxu0 %v1941
    %2071 = vmatpush2.bf16.msra.mxu0 %v1940
    %2072 = vmatprep.subr.bf16.mxu0 %v1939
    %2073 = vmatpush2.bf16.msra.mxu0 %v1938
    %2074 = vmatprep.subr.bf16.mxu0 %v1937
    %2075 = vmatpush2.bf16.msra.mxu0 %v1936
    %2076 = vmatprep.subr.bf16.mxu0 %v1935
    %2077 = vmatpush2.bf16.msra.mxu0 %v1934
    %2078 = vmatprep.mubr.bf16.mxu0 %v1647
    %2079 = vmatmul.mubr.bf16.gmra.mxu0 %v1646
    %v2080 = vpop.f32.mrf.mxu0
    %v2081 = vadd.f32 %v1719, %v2080
    %v2082 = vpop.f32.mrf.mxu0
    %v2083 = vadd.f32 %v1723, %v2082
    %v2084 = vpop.f32.mrf.mxu0
    %v2085 = vpop.f32.mrf.mxu0
    %2086 = vdwg.mxu0
    %2087 = vmatprep.subr.bf16.mxu0 %v1965
    %2088 = vmatpush1.bf16.msra.mxu0 %v1964
    %2089 = vmatprep.subr.bf16.mxu0 %v1963
    %2090 = vmatpush1.bf16.msra.mxu0 %v1962
    %2091 = vmatprep.subr.bf16.mxu0 %v1961
    %2092 = vmatpush1.bf16.msra.mxu0 %v1960
    %2093 = vmatprep.subr.bf16.mxu0 %v1959
    %2094 = vmatpush1.bf16.msra.mxu0 %v1958
    %2095 = vmatprep.subr.bf16.mxu0 %v1957
    %2096 = vmatpush1.bf16.msra.mxu0 %v1956
    %2097 = vmatprep.subr.bf16.mxu0 %v1955
    %2098 = vmatpush1.bf16.msra.mxu0 %v1954
    %2099 = vmatprep.subr.bf16.mxu0 %v1953
    %2100 = vmatpush1.bf16.msra.mxu0 %v1952
    %2101 = vmatprep.subr.bf16.mxu0 %v1951
    %2102 = vmatpush1.bf16.msra.mxu0 %v1950
    %2103 = vmatprep.subr.bf16.mxu0 %v1981
    %2104 = vmatpush2.bf16.msra.mxu0 %v1980
    %2105 = vmatprep.subr.bf16.mxu0 %v1979
    %2106 = vmatpush2.bf16.msra.mxu0 %v1978
    %2107 = vmatprep.subr.bf16.mxu0 %v1977
    %2108 = vmatpush2.bf16.msra.mxu0 %v1976
    %2109 = vmatprep.subr.bf16.mxu0 %v1975
    %2110 = vmatpush2.bf16.msra.mxu0 %v1974
    %2111 = vmatprep.subr.bf16.mxu0 %v1973
    %2112 = vmatpush2.bf16.msra.mxu0 %v1972
    %2113 = vmatprep.subr.bf16.mxu0 %v1971
    %2114 = vmatpush2.bf16.msra.mxu0 %v1970
    %2115 = vmatprep.subr.bf16.mxu0 %v1969
    %2116 = vmatpush2.bf16.msra.mxu0 %v1968
    %2117 = vmatprep.subr.bf16.mxu0 %v1967
    %2118 = vmatpush2.bf16.msra.mxu0 %v1966
    %2119 = vmatprep.mubr.bf16.mxu0 %v1649
    %2120 = vmatmul.mubr.bf16.gmra.mxu0 %v1648
    %v2121 = vpop.f32.mrf.mxu0
    %v2122 = vadd.f32 %v2081, %v2121
    %v2123 = vpop.f32.mrf.mxu0
    %v2124 = vadd.f32 %v2083, %v2123
    %v2125 = vpop.f32.mrf.mxu0
    %v2126 = vpop.f32.mrf.mxu0
    %2127 = vdwg.mxu0
    %v2128 = vmax.f32 %v2122, 0.0
    %v2129 = vmax.f32 %v2124, 0.0
    %v2130 = vadd.f32 %v2128, %v2129
    %2131 = vadd.xlane.f32.xlu0 %v2130
    %v2132 = vpop.xlane.xlu0 %2131
    %v2133 = vrcp.pop 256.0
    %v2134 = vmul.f32 %v2132, %v2133
    %v2135 = vsub.f32 %v2128, %v2134
    %v2136 = vsub.f32 %v2129, %v2134
    %v2137 = vmul.f32 %v2135, %v2135
    %v2138 = vmul.f32 %v2136, %v2136
    %v2139 = vadd.f32 %v2137, %v2138
    %2140 = vadd.xlane.f32.xlu0 %v2139
    %v2141 = vpop.xlane.xlu0 %2140
    %v2142 = vmul.f32 %v2141, %v2133
    %v2143 = vadd.f32 %v2142, 1e-05
    %v2144 = vrsqrt.pop %v2143
    %v2145 = vmul.f32 %v2135, %v2144
    %v2146 = vmul.f32 %v2136, %v2144
    %v2147 = vld [vmem:[%s5] sm:$0x3]
    %v2149 = vlaneseq
    %v2150 = vshrl.u32 %v2149, 7
    %v2151 = vsub.s32 0, %v2150
    %v2152 = vrot.slane %v2147, %v2151
    %v2153 = vlaneseq
    %v2154 = vshrl.u32 %v2153, 7
    %v2155 = vsub.s32 1, %v2154
    %v2156 = vrot.slane %v2147, %v2155
    %v2159 = vmul.f32 %v2145, %v2152
    %v2160 = vmul.f32 %v2146, %v2156
    %v2161 = vld [vmem:[%s6] sm:$0x3]
    %v2163 = vlaneseq
    %v2164 = vshrl.u32 %v2163, 7
    %v2165 = vsub.s32 0, %v2164
    %v2166 = vrot.slane %v2161, %v2165
    %v2167 = vlaneseq
    %v2168 = vshrl.u32 %v2167, 7
    %v2169 = vsub.s32 1, %v2168
    %v2170 = vrot.slane %v2161, %v2169
    %v2173 = vadd.f32 %v2159, %v2166
    %v2174 = vadd.f32 %v2160, %v2170
    %v2175 = vpack.c.bf16 %v2173, %v2173
    %v2176 = vpack.c.bf16 %v2174, %v2174
    %v2177 = vld [vmem:[#allocation10] sm:$0xf]
    %v2178 = vld [vmem:[#allocation10 + $0x4] sm:$0xf]
    %v2179 = vld [vmem:[#allocation10 + $0x8] sm:$0xf]
    %v2180 = vld [vmem:[#allocation10 + $0xc] sm:$0xf]
    %v2181 = vld [vmem:[#allocation10 + $0x10] sm:$0xf]
    %v2182 = vld [vmem:[#allocation10 + $0x14] sm:$0xf]
    %v2183 = vld [vmem:[#allocation10 + $0x18] sm:$0xf]
    %v2184 = vld [vmem:[#allocation10 + $0x1c] sm:$0xf]
    %v2185 = vld [vmem:[#allocation10 + $0x20] sm:$0xf]
    %v2186 = vld [vmem:[#allocation10 + $0x24] sm:$0xf]
    %v2187 = vld [vmem:[#allocation10 + $0x28] sm:$0xf]
    %v2188 = vld [vmem:[#allocation10 + $0x2c] sm:$0xf]
    %v2189 = vld [vmem:[#allocation10 + $0x30] sm:$0xf]
    %v2190 = vld [vmem:[#allocation10 + $0x34] sm:$0xf]
    %v2191 = vld [vmem:[#allocation10 + $0x38] sm:$0xf]
    %v2192 = vld [vmem:[#allocation10 + $0x3c] sm:$0xf]
    %v2193 = vld [vmem:[#allocation10 + $0x40] sm:$0xf]
    %v2194 = vld [vmem:[#allocation10 + $0x44] sm:$0xf]
    %v2195 = vld [vmem:[#allocation10 + $0x48] sm:$0xf]
    %v2196 = vld [vmem:[#allocation10 + $0x4c] sm:$0xf]
    %v2197 = vld [vmem:[#allocation10 + $0x50] sm:$0xf]
    %v2198 = vld [vmem:[#allocation10 + $0x54] sm:$0xf]
    %v2199 = vld [vmem:[#allocation10 + $0x58] sm:$0xf]
    %v2200 = vld [vmem:[#allocation10 + $0x5c] sm:$0xf]
    %v2201 = vld [vmem:[#allocation10 + $0x60] sm:$0xf]
    %v2202 = vld [vmem:[#allocation10 + $0x64] sm:$0xf]
    %v2203 = vld [vmem:[#allocation10 + $0x68] sm:$0xf]
    %v2204 = vld [vmem:[#allocation10 + $0x6c] sm:$0xf]
    %v2205 = vld [vmem:[#allocation10 + $0x70] sm:$0xf]
    %v2206 = vld [vmem:[#allocation10 + $0x74] sm:$0xf]
    %v2207 = vld [vmem:[#allocation10 + $0x78] sm:$0xf]
    %v2208 = vld [vmem:[#allocation10 + $0x7c] sm:$0xf]
    %v2209 = vld [vmem:[%s8] sm:$0x1]
    %v2211 = vlaneseq
    %v2212 = vshrl.u32 %v2211, 7
    %v2213 = vsub.s32 0, %v2212
    %v2214 = vrot.slane %v2209, %v2213
    %v2248 = vunpack.c.l.b16 %v2177
    %v2249 = vunpack.c.l.b16 %v2178
    %v2250 = vunpack.c.l.b16 %v2179
    %v2251 = vunpack.c.l.b16 %v2180
    %v2252 = vunpack.c.l.b16 %v2181
    %v2253 = vunpack.c.l.b16 %v2182
    %v2254 = vunpack.c.l.b16 %v2183
    %v2255 = vunpack.c.l.b16 %v2184
    %v2256 = vunpack.c.l.b16 %v2185
    %v2257 = vunpack.c.l.b16 %v2186
    %v2258 = vunpack.c.l.b16 %v2187
    %v2259 = vunpack.c.l.b16 %v2188
    %v2260 = vunpack.c.l.b16 %v2189
    %v2261 = vunpack.c.l.b16 %v2190
    %v2262 = vunpack.c.l.b16 %v2191
    %v2263 = vunpack.c.l.b16 %v2192
    %v2264 = vunpack.c.l.b16 %v2193
    %v2265 = vunpack.c.l.b16 %v2194
    %v2266 = vunpack.c.l.b16 %v2195
    %v2267 = vunpack.c.l.b16 %v2196
    %v2268 = vunpack.c.l.b16 %v2197
    %v2269 = vunpack.c.l.b16 %v2198
    %v2270 = vunpack.c.l.b16 %v2199
    %v2271 = vunpack.c.l.b16 %v2200
    %v2272 = vunpack.c.l.b16 %v2201
    %v2273 = vunpack.c.l.b16 %v2202
    %v2274 = vunpack.c.l.b16 %v2203
    %v2275 = vunpack.c.l.b16 %v2204
    %v2276 = vunpack.c.l.b16 %v2205
    %v2277 = vunpack.c.l.b16 %v2206
    %v2278 = vunpack.c.l.b16 %v2207
    %v2279 = vunpack.c.l.b16 %v2208
    %v2280 = vpack.c.b16 %v2249, %v2248
    %v2281 = vpack.c.b16 %v2251, %v2250
    %v2282 = vpack.c.b16 %v2253, %v2252
    %v2283 = vpack.c.b16 %v2255, %v2254
    %v2284 = vpack.c.b16 %v2257, %v2256
    %v2285 = vpack.c.b16 %v2259, %v2258
    %v2286 = vpack.c.b16 %v2261, %v2260
    %v2287 = vpack.c.b16 %v2263, %v2262
    %v2288 = vpack.c.b16 %v2265, %v2264
    %v2289 = vpack.c.b16 %v2267, %v2266
    %v2290 = vpack.c.b16 %v2269, %v2268
    %v2291 = vpack.c.b16 %v2271, %v2270
    %v2292 = vpack.c.b16 %v2273, %v2272
    %v2293 = vpack.c.b16 %v2275, %v2274
    %v2294 = vpack.c.b16 %v2277, %v2276
    %v2295 = vpack.c.b16 %v2279, %v2278
    %2312 = vmatprep.subr.bf16.mxu0 0
    %2313 = vmatpush1.bf16.msra.mxu0 %v2287
    %2314 = vmatprep.subr.bf16.mxu0 0
    %2315 = vmatpush1.bf16.msra.mxu0 %v2286
    %2316 = vmatprep.subr.bf16.mxu0 0
    %2317 = vmatpush1.bf16.msra.mxu0 %v2285
    %2318 = vmatprep.subr.bf16.mxu0 0
    %2319 = vmatpush1.bf16.msra.mxu0 %v2284
    %2320 = vmatprep.subr.bf16.mxu0 0
    %2321 = vmatpush1.bf16.msra.mxu0 %v2283
    %2322 = vmatprep.subr.bf16.mxu0 0
    %2323 = vmatpush1.bf16.msra.mxu0 %v2282
    %2324 = vmatprep.subr.bf16.mxu0 0
    %2325 = vmatpush1.bf16.msra.mxu0 %v2281
    %2326 = vmatprep.subr.bf16.mxu0 0
    %2327 = vmatpush1.bf16.msra.mxu0 %v2280
    %2328 = vmatprep.subr.bf16.mxu0 0
    %2329 = vmatpush2.bf16.msra.mxu0 %v2295
    %2330 = vmatprep.subr.bf16.mxu0 0
    %2331 = vmatpush2.bf16.msra.mxu0 %v2294
    %2332 = vmatprep.subr.bf16.mxu0 0
    %2333 = vmatpush2.bf16.msra.mxu0 %v2293
    %2334 = vmatprep.subr.bf16.mxu0 0
    %2335 = vmatpush2.bf16.msra.mxu0 %v2292
    %2336 = vmatprep.subr.bf16.mxu0 0
    %2337 = vmatpush2.bf16.msra.mxu0 %v2291
    %2338 = vmatprep.subr.bf16.mxu0 0
    %2339 = vmatpush2.bf16.msra.mxu0 %v2290
    %2340 = vmatprep.subr.bf16.mxu0 0
    %2341 = vmatpush2.bf16.msra.mxu0 %v2289
    %2342 = vmatprep.subr.bf16.mxu0 0
    %2343 = vmatpush2.bf16.msra.mxu0 %v2288
    %2344 = vmatprep.mubr.bf16.mxu0 %v2176
    %2345 = vmatmul.mubr.bf16.gmra.mxu0 %v2175
    %v2346 = vpop.f32.mrf.mxu0
    %v2347 = vadd.f32 %v2214, %v2346
    %v2348 = vpop.f32.mrf.mxu0
    %v2349 = vpop.f32.mrf.mxu0
    %v2350 = vpop.f32.mrf.mxu0
    %2351 = vdwg.mxu0
    %2352 = vst [vmem:[#allocation11] sm:$0xff] %v2347
    // Predicated region
    $region58: #{tpu_custom_call.1} parent=1 // pred_check
      _
    $region59: #{tpu_custom_call.1} parent=1 // pred_check_branch
      %2354 = sbr.rel (0) target = $region61
    $region60: #{tpu_custom_call.1} parent=1 // pred_region
      %s2356 = ssub.s32 128, 128
      %2357 = vsyncadd [#allocation4], %s2356
      %s2359 = sshll.u32 [#allocation11], 4
      %s2360 = int_to_ptr.vmem [resolvable:$true] %s2359
      %2362 = dma.vmem_to_hbm [thread:$0]  %s2360, 128, %s9, [#allocation4]
    $region61: #{tpu_custom_call.1} parent=1 // pred_fallthru
      _
    // Predicated region
    $region62: #{tpu_custom_call.1} parent=1 // pred_check
      _
    $region63: #{tpu_custom_call.1} parent=1 // pred_check_branch
      %2364 = sbr.rel (0) target = $region65
    $region64: #{tpu_custom_call.1} parent=1 // pred_region
      %2365 = dma.done [#allocation4], 128
    $region65: #{tpu_custom_call.1} parent=1 // pred_fallthru
      _
    %2366 = vsyncpa [#allocation3], 1
    %2367 = vsyncpa [#allocation6], 1
    %2368 = vsyncpa [#allocation9], 1
    %2369 = vsyncpa [#allocation4], 1

</llo_original>
